<compile_context>
chip_gen: v7x
topology: tpu7x:2x2x1
jax: 0.10.0
libtpu: 0.0.40
codegen_flags: <defaults>
</compile_context>

<pallas_src>
import jax
import jax.numpy as jnp
import numpy as np
from jax.experimental import pallas as pl
from jax.experimental.pallas import tpu as pltpu


# --------- fused maxpool + DoubleConv(+BN+ReLU) + emb-add kernel ----------
def _downsample_kernel(x_ref, eo_ref, w1_ref, w2_ref, s1_ref, b1_ref,
                       s2_ref, b2_ref, o_ref, xpad_ref, hpad_ref):
    # x_ref : (1, H, Wo, 2*Cin)  one batch; W folded as (Wo, 2*Cin) so the
    #                            2x2-pool column pair sits on the lane axis
    # eo_ref: (1, 1, Cout)       precomputed Linear(SiLU(emb)) for this batch
    # w1_ref: (9*Cin, Cout)      conv1 weights, im2col (dy, dx, cin) layout, bf16
    # w2_ref: (9*Cout, Cout)     conv2 weights, im2col layout, bf16
    # s*/b* : (1, Cout)          folded BN scale / bias (incl. conv bias), f32
    # o_ref : (1, Ho*Wo, Cout)   lane-dense output block (matmul-natural layout)
    # xpad_ref: (Ho+2, Wo+2, Cin)   VMEM scratch: zero-padded pooled input
    # hpad_ref: (Ho+2, Wo+2, Cout)  VMEM scratch: zero-padded conv1 output
    _, H, Wo, Cin2 = x_ref.shape
    Cin = Cin2 // 2
    Ho = H // 2
    Cout = s1_ref.shape[-1]
    Hp, Wp = Ho + 2, Wo + 2

    # ---- fused 2x2 max-pool (value ops only; no strided ref indexing) ----
    x = x_ref[0].astype(jnp.float32)                       # (H, Wo, 2*Cin)
    xc = jnp.maximum(x[:, :, :Cin], x[:, :, Cin:])         # W-pair max -> (H, Wo, Cin)
    xr = xc.reshape(Ho, 2, Wo, Cin)                        # split leading dim only
    xp = jnp.maximum(xr[:, 0], xr[:, 1])                   # H-pair max -> (Ho, Wo, Cin)

    # ---- zero-pad pooled input into scratch (border re-zeroed every step;
    #      interior fully overwritten -> parallel-grid / megacore safe) ----
    xpad_ref[0:1, :, :] = jnp.zeros((1, Wp, Cin), jnp.float32)
    xpad_ref[Hp - 1:Hp, :, :] = jnp.zeros((1, Wp, Cin), jnp.float32)
    xpad_ref[:, 0:1, :] = jnp.zeros((Hp, 1, Cin), jnp.float32)
    xpad_ref[:, Wp - 1:Wp, :] = jnp.zeros((Hp, 1, Cin), jnp.float32)
    xpad_ref[1:1 + Ho, 1:1 + Wo, :] = xp

    # ---- conv1: 9 accumulating MXU dots (bf16 operands, f32 accumulate) ----
    acc = jnp.zeros((Ho * Wo, Cout), jnp.float32)
    k = 0
    for dy in range(3):
        for dx in range(3):
            lhs = xpad_ref[dy:dy + Ho, dx:dx + Wo, :].reshape(Ho * Wo, Cin)
            acc = acc + jnp.dot(lhs.astype(jnp.bfloat16),
                                w1_ref[k * Cin:(k + 1) * Cin, :],
                                preferred_element_type=jnp.float32)
            k += 1
    h1 = jnp.maximum(acc * s1_ref[...] + b1_ref[...], 0.0)   # BN + ReLU (f32)

    # ---- zero-pad conv1 output (border only) ----
    hpad_ref[0:1, :, :] = jnp.zeros((1, Wp, Cout), jnp.float32)
    hpad_ref[Hp - 1:Hp, :, :] = jnp.zeros((1, Wp, Cout), jnp.float32)
    hpad_ref[:, 0:1, :] = jnp.zeros((Hp, 1, Cout), jnp.float32)
    hpad_ref[:, Wp - 1:Wp, :] = jnp.zeros((Hp, 1, Cout), jnp.float32)
    hpad_ref[1:1 + Ho, 1:1 + Wo, :] = h1.reshape(Ho, Wo, Cout)

    # ---- conv2: 9 accumulating MXU dots ----
    acc = jnp.zeros((Ho * Wo, Cout), jnp.float32)
    k = 0
    for dy in range(3):
        for dx in range(3):
            lhs = hpad_ref[dy:dy + Ho, dx:dx + Wo, :].reshape(Ho * Wo, Cout)
            acc = acc + jnp.dot(lhs.astype(jnp.bfloat16),
                                w2_ref[k * Cout:(k + 1) * Cout, :],
                                preferred_element_type=jnp.float32)
            k += 1
    h2 = jnp.maximum(acc * s2_ref[...] + b2_ref[...], 0.0)   # BN + ReLU (f32)

    # ---- + emb projection, ONE lane-dense full-block store ----
    o_ref[0] = (h2 + eo_ref[0]).astype(o_ref.dtype)


def downsample_fused(x_folded, eo, w1f, w2f, s1, b1, s2, b2, out_dtype):
    N, H, Wo, Cin2 = x_folded.shape
    Cin = Cin2 // 2
    Ho = H // 2
    Cout = w1f.shape[-1]
    Hp, Wp = Ho + 2, Wo + 2
    eo3 = eo.reshape(N, 1, Cout)

    # Scoped-VMEM budget: double-buffered in/out blocks + scratches + weights,
    # with 2x headroom; floored at the v6e default and capped below v7x's
    # 64 MiB physical VMEM per TensorCore.
    out_isz = np.dtype(out_dtype).itemsize
    in_blk = H * Wo * Cin2 * np.dtype(x_folded.dtype).itemsize
    out_blk = Ho * Wo * Cout * out_isz
    scratch_b = Hp * Wp * (Cin + Cout) * 4
    weights_b = (9 * Cin * Cout + 9 * Cout * Cout) * 2 + 5 * Cout * 4
    est = 2 * (in_blk + out_blk + Cout * 4) + scratch_b + weights_b
    vmem_limit = int(min(max(2 * est, 32 << 20), 64 << 20))

    return pl.pallas_call(
        _downsample_kernel,
        out_shape=jax.ShapeDtypeStruct((N, Ho * Wo, Cout), out_dtype),
        grid=(N,),
        in_specs=[
            pl.BlockSpec((1, H, Wo, Cin2), lambda n: (n, 0, 0, 0)),  # x (folded)
            pl.BlockSpec((1, 1, Cout), lambda n: (n, 0, 0)),         # emb proj
            pl.BlockSpec((9 * Cin, Cout), lambda n: (0, 0)),         # w1 (im2col, bf16)
            pl.BlockSpec((9 * Cout, Cout), lambda n: (0, 0)),        # w2 (im2col, bf16)
            pl.BlockSpec((1, Cout), lambda n: (0, 0)),               # s1
            pl.BlockSpec((1, Cout), lambda n: (0, 0)),               # b1
            pl.BlockSpec((1, Cout), lambda n: (0, 0)),               # s2
            pl.BlockSpec((1, Cout), lambda n: (0, 0)),               # b2
        ],
        out_specs=pl.BlockSpec((1, Ho * Wo, Cout), lambda n: (n, 0, 0)),
        scratch_shapes=[
            pltpu.VMEM((Hp, Wp, Cin), jnp.float32),    # padded pooled input
            pltpu.VMEM((Hp, Wp, Cout), jnp.float32),   # padded conv1 output
        ],
        compiler_params=pltpu.CompilerParams(
            # batches are independent -> shard over v7x's 2 TensorCores;
            # harmless on v5e/v6e.
            dimension_semantics=("parallel",),
            vmem_limit_bytes=vmem_limit,
        ),
    )(x_folded, eo3, w1f, w2f, s1, b1, s2, b2)


# ------------------------------ module wrapper --------------------------------
@jax.jit
def downsample_forward(x_nchw, emb, params):
    """Pallas implementation of DownSample.forward(x, emb). x is NCHW."""
    w1, w2, s1, b1, s2, b2, we, be = params
    N, Cin, H, W = x_nchw.shape
    assert H % 2 == 0 and W % 2 == 0, "MaxPool2d(2) needs even H and W"
    Cout = w1.shape[-1]

    # NCHW -> NHWC, then fold the 2x2-pool column pair + channels onto the
    # lane axis: (N, H, W, Cin) -> (N, H, W/2, 2*Cin)
    x_folded = jnp.transpose(x_nchw, (0, 2, 3, 1)).reshape(N, H, W // 2, 2 * Cin)

    # conv weights in im2col layout, bf16 for the MXU (accumulate stays f32)
    w1f = w1.reshape(9 * Cin, Cout).astype(jnp.bfloat16)
    w2f = w2.reshape(9 * Cout, Cout).astype(jnp.bfloat16)

    # emb path (SiLU -> Linear): tiny matmul, plain XLA, hoisted out of the grid
    eo = (emb * jax.nn.sigmoid(emb)) @ we + be               # (N, Cout) f32

    out = downsample_fused(x_folded, eo, w1f, w2f, s1, b1, s2, b2, x_nchw.dtype)
    Ho, Wo = H // 2, W // 2
    return jnp.transpose(out.reshape(N, Ho, Wo, Cout), (0, 3, 1, 2))  # -> NCHW


# ------------------------------ pure-JAX reference ----------------------------
def ref_forward(x_nchw, emb, params):
    w1, w2, s1, b1, s2, b2, we, be = params
    x = jnp.transpose(x_nchw, (0, 2, 3, 1))
    N, H, W, C = x.shape
    pooled = jnp.max(x.reshape(N, H // 2, 2, W // 2, 2, C), axis=(2, 4))

    def conv_bn_relu(h, w, s, b):
        y = jax.lax.conv_general_dilated(
            h, w, (1, 1), "SAME", dimension_numbers=("NHWC", "HWIO", "NHWC"))
        return jnp.maximum(y * s.reshape(1, 1, 1, -1) + b.reshape(1, 1, 1, -1), 0.0)

    h = conv_bn_relu(pooled, w1, s1, b1)
    h = conv_bn_relu(h, w2, s2, b2)
    e = emb * jax.nn.sigmoid(emb)
    eo = e @ we + be.reshape(1, -1)
    out = h + eo[:, None, None, :]
    return jnp.transpose(out, (0, 3, 1, 2))


# ------------------------------------ main -------------------------------------
if __name__ == "__main__":
    N, C_in, C_out, H, W, E = 2, 4, 8, 16, 16, 16
    eps = 1e-5

    key = jax.random.PRNGKey(0)
    ks = jax.random.split(key, 20)

    x = jax.random.normal(ks[0], (N, C_in, H, W), jnp.float32)
    emb = jax.random.normal(ks[1], (N, E), jnp.float32)

    # conv1 + BN1 (HWIO conv weights)
    w1 = 0.1 * jax.random.normal(ks[2], (3, 3, C_in, C_out), jnp.float32)
    cb1 = 0.1 * jax.random.normal(ks[3], (C_out,), jnp.float32)
    g1 = 1.0 + 0.1 * jax.random.normal(ks[4], (C_out,), jnp.float32)
    be1 = 0.1 * jax.random.normal(ks[5], (C_out,), jnp.float32)
    m1 = 0.1 * jax.random.normal(ks[6], (C_out,), jnp.float32)
    v1 = jnp.abs(jax.random.normal(ks[7], (C_out,), jnp.float32)) + 0.5
    # conv2 + BN2
    w2 = 0.1 * jax.random.normal(ks[8], (3, 3, C_out, C_out), jnp.float32)
    cb2 = 0.1 * jax.random.normal(ks[9], (C_out,), jnp.float32)
    g2 = 1.0 + 0.1 * jax.random.normal(ks[10], (C_out,), jnp.float32)
    be2 = 0.1 * jax.random.normal(ks[11], (C_out,), jnp.float32)
    m2 = 0.1 * jax.random.normal(ks[12], (C_out,), jnp.float32)
    v2 = jnp.abs(jax.random.normal(ks[13], (C_out,), jnp.float32)) + 0.5
    # emb Linear (E -> C_out)
    we = 0.1 * jax.random.normal(ks[14], (E, C_out), jnp.float32)
    lb = 0.1 * jax.random.normal(ks[15], (C_out,), jnp.float32)

    # fold (conv bias + inference-mode BN) into per-channel scale / bias
    s1 = g1 / jnp.sqrt(v1 + eps)
    b1 = be1 + (cb1 - m1) * s1
    s2 = g2 / jnp.sqrt(v2 + eps)
    b2 = be2 + (cb2 - m2) * s2

    params = (w1, w2,
              s1.reshape(1, C_out), b1.reshape(1, C_out),
              s2.reshape(1, C_out), b2.reshape(1, C_out),
              we, lb.reshape(1, C_out))

    out = downsample_forward(x, emb, params)
    out = jax.block_until_ready(out)
    assert out.shape == (N, C_out, H // 2, W // 2), out.shape

    ref = ref_forward(x, emb, params)
    np.testing.assert_allclose(np.asarray(out), np.asarray(ref),
                               rtol=2e-2, atol=2e-2)
    print("KERNEL_OK")
</pallas_src>

<mosaic_0001>
module attributes {stable_mosaic.version = 11 : i64} {
  func.func @_downsample_kernel(%arg0: i32, %arg1: memref<1x16x8x8xf32, #tpu.memory_space<vmem>>, %arg2: memref<1x1x8xf32, #tpu.memory_space<vmem>>, %arg3: memref<36x8xbf16, #tpu.memory_space<vmem>>, %arg4: memref<72x8xbf16, #tpu.memory_space<vmem>>, %arg5: memref<1x8xf32, #tpu.memory_space<vmem>>, %arg6: memref<1x8xf32, #tpu.memory_space<vmem>>, %arg7: memref<1x8xf32, #tpu.memory_space<vmem>>, %arg8: memref<1x8xf32, #tpu.memory_space<vmem>>, %arg9: memref<1x64x8xf32, #tpu.memory_space<vmem>>, %arg10: memref<10x10x4xf32, #tpu.memory_space<vmem>>, %arg11: memref<10x10x8xf32, #tpu.memory_space<vmem>>) attributes {dimension_semantics = [#tpu.dimension_semantics<parallel>], iteration_bounds = array<i64: 2>, scalar_prefetch = 0 : i64, scratch_operands = 2 : i64, tpu.core_type = #tpu.core_type<tc>, window_params = [{transform_indices = @transform_0, window_bounds = array<i64: 1, 16, 8, 8>}, {transform_indices = @transform_1, window_bounds = array<i64: 1, 1, 8>}, {pipeline_mode = #tpu.pipeline_mode<synchronous>, transform_indices = @transform_2, window_bounds = array<i64: 36, 8>}, {pipeline_mode = #tpu.pipeline_mode<synchronous>, transform_indices = @transform_3, window_bounds = array<i64: 72, 8>}, {pipeline_mode = #tpu.pipeline_mode<synchronous>, transform_indices = @transform_4, window_bounds = array<i64: 1, 8>}, {pipeline_mode = #tpu.pipeline_mode<synchronous>, transform_indices = @transform_5, window_bounds = array<i64: 1, 8>}, {pipeline_mode = #tpu.pipeline_mode<synchronous>, transform_indices = @transform_6, window_bounds = array<i64: 1, 8>}, {pipeline_mode = #tpu.pipeline_mode<synchronous>, transform_indices = @transform_7, window_bounds = array<i64: 1, 8>}, {transform_indices = @transform_8, window_bounds = array<i64: 1, 64, 8>}]} {
    %c0 = arith.constant 0 : index
    %c0_0 = arith.constant 0 : index
    %c0_1 = arith.constant 0 : index
    %c0_2 = arith.constant 0 : index
    %0 = vector.load %arg1[%c0, %c0_0, %c0_1, %c0_2] : memref<1x16x8x8xf32, #tpu.memory_space<vmem>>, vector<1x16x8x8xf32>
    %1 = vector.shape_cast %0 : vector<1x16x8x8xf32> to vector<16x8x8xf32>
    %2 = vector.extract_strided_slice %1 {offsets = [0, 0, 0], sizes = [16, 8, 4], strides = [1, 1, 1]} : vector<16x8x8xf32> to vector<16x8x4xf32>
    %3 = vector.extract_strided_slice %1 {offsets = [0, 0, 4], sizes = [16, 8, 4], strides = [1, 1, 1]} : vector<16x8x8xf32> to vector<16x8x4xf32>
    %4 = arith.maximumf %2, %3 : vector<16x8x4xf32>
    %5 = vector.shape_cast %4 : vector<16x8x4xf32> to vector<8x2x8x4xf32>
    %6 = vector.extract_strided_slice %5 {offsets = [0, 0, 0, 0], sizes = [8, 1, 8, 4], strides = [1, 1, 1, 1]} : vector<8x2x8x4xf32> to vector<8x1x8x4xf32>
    %7 = vector.shape_cast %6 : vector<8x1x8x4xf32> to vector<8x8x4xf32>
    %8 = vector.extract_strided_slice %5 {offsets = [0, 1, 0, 0], sizes = [8, 1, 8, 4], strides = [1, 1, 1, 1]} : vector<8x2x8x4xf32> to vector<8x1x8x4xf32>
    %9 = vector.shape_cast %8 : vector<8x1x8x4xf32> to vector<8x8x4xf32>
    %10 = arith.maximumf %7, %9 : vector<8x8x4xf32>
    %cst = arith.constant 0.000000e+00 : f32
    %11 = vector.broadcast %cst : f32 to vector<1x10x4xf32>
    %c0_3 = arith.constant 0 : index
    %c0_4 = arith.constant 0 : index
    %c0_5 = arith.constant 0 : index
    %12 = vector.load %arg10[%c0_3, %c0_4, %c0_5] : memref<10x10x4xf32, #tpu.memory_space<vmem>>, vector<1x10x4xf32>
    tpu.vector_store %arg10[%c0_3, %c0_4, %c0_5], %11 {strides = array<i32>} : memref<10x10x4xf32, #tpu.memory_space<vmem>>, vector<1x10x4xf32>,
    %cst_6 = arith.constant 0.000000e+00 : f32
    %13 = vector.broadcast %cst_6 : f32 to vector<1x10x4xf32>
    %c9 = arith.constant 9 : index
    %c0_7 = arith.constant 0 : index
    %c0_8 = arith.constant 0 : index
    %14 = vector.load %arg10[%c9, %c0_7, %c0_8] : memref<10x10x4xf32, #tpu.memory_space<vmem>>, vector<1x10x4xf32>
    tpu.vector_store %arg10[%c9, %c0_7, %c0_8], %13 {strides = array<i32>} : memref<10x10x4xf32, #tpu.memory_space<vmem>>, vector<1x10x4xf32>,
    %cst_9 = arith.constant 0.000000e+00 : f32
    %15 = vector.broadcast %cst_9 : f32 to vector<10x1x4xf32>
    %c0_10 = arith.constant 0 : index
    %c0_11 = arith.constant 0 : index
    %c0_12 = arith.constant 0 : index
    %16 = vector.load %arg10[%c0_10, %c0_11, %c0_12] : memref<10x10x4xf32, #tpu.memory_space<vmem>>, vector<10x1x4xf32>
    tpu.vector_store %arg10[%c0_10, %c0_11, %c0_12], %15 {strides = array<i32>} : memref<10x10x4xf32, #tpu.memory_space<vmem>>, vector<10x1x4xf32>,
    %cst_13 = arith.constant 0.000000e+00 : f32
    %17 = vector.broadcast %cst_13 : f32 to vector<10x1x4xf32>
    %c0_14 = arith.constant 0 : index
    %c9_15 = arith.constant 9 : index
    %c0_16 = arith.constant 0 : index
    %18 = vector.load %arg10[%c0_14, %c9_15, %c0_16] : memref<10x10x4xf32, #tpu.memory_space<vmem>>, vector<10x1x4xf32>
    tpu.vector_store %arg10[%c0_14, %c9_15, %c0_16], %17 {strides = array<i32>} : memref<10x10x4xf32, #tpu.memory_space<vmem>>, vector<10x1x4xf32>,
    %c1 = arith.constant 1 : index
    %c1_17 = arith.constant 1 : index
    %c0_18 = arith.constant 0 : index
    %19 = vector.load %arg10[%c1, %c1_17, %c0_18] : memref<10x10x4xf32, #tpu.memory_space<vmem>>, vector<8x8x4xf32>
    tpu.vector_store %arg10[%c1, %c1_17, %c0_18], %10 {strides = array<i32>} : memref<10x10x4xf32, #tpu.memory_space<vmem>>, vector<8x8x4xf32>,
    %cst_19 = arith.constant 0.000000e+00 : f32
    %20 = vector.broadcast %cst_19 : f32 to vector<64x8xf32>
    %c0_20 = arith.constant 0 : index
    %c0_21 = arith.constant 0 : index
    %c0_22 = arith.constant 0 : index
    %21 = vector.load %arg10[%c0_20, %c0_21, %c0_22] : memref<10x10x4xf32, #tpu.memory_space<vmem>>, vector<8x8x4xf32>
    %22 = vector.shape_cast %21 : vector<8x8x4xf32> to vector<64x4xf32>
    %23 = arith.truncf %22 : vector<64x4xf32> to vector<64x4xbf16>
    %c0_23 = arith.constant 0 : index
    %c0_24 = arith.constant 0 : index
    %24 = vector.load %arg3[%c0_23, %c0_24] : memref<36x8xbf16, #tpu.memory_space<vmem>>, vector<4x8xbf16>
    %cst_25 = arith.constant dense<0.000000e+00> : vector<64x8xf32>
    %25 = tpu.matmul %23, %24, %cst_25 {dimension_numbers = #tpu.dot_dimension_numbers<[1], [0], [0], [1], [0, 0, 1, 1], [], []>} : vector<64x4xbf16>, vector<4x8xbf16>, vector<64x8xf32> -> vector<64x8xf32>
    %26 = arith.addf %20, %25 : vector<64x8xf32>
    %c0_26 = arith.constant 0 : index
    %c1_27 = arith.constant 1 : index
    %c0_28 = arith.constant 0 : index
    %27 = vector.load %arg10[%c0_26, %c1_27, %c0_28] : memref<10x10x4xf32, #tpu.memory_space<vmem>>, vector<8x8x4xf32>
    %28 = vector.shape_cast %27 : vector<8x8x4xf32> to vector<64x4xf32>
    %29 = arith.truncf %28 : vector<64x4xf32> to vector<64x4xbf16>
    %c4 = arith.constant 4 : index
    %c0_29 = arith.constant 0 : index
    %30 = vector.load %arg3[%c4, %c0_29] : memref<36x8xbf16, #tpu.memory_space<vmem>>, vector<4x8xbf16>
    %cst_30 = arith.constant dense<0.000000e+00> : vector<64x8xf32>
    %31 = tpu.matmul %29, %30, %cst_30 {dimension_numbers = #tpu.dot_dimension_numbers<[1], [0], [0], [1], [0, 0, 1, 1], [], []>} : vector<64x4xbf16>, vector<4x8xbf16>, vector<64x8xf32> -> vector<64x8xf32>
    %32 = arith.addf %26, %31 : vector<64x8xf32>
    %c0_31 = arith.constant 0 : index
    %c2 = arith.constant 2 : index
    %c0_32 = arith.constant 0 : index
    %33 = vector.load %arg10[%c0_31, %c2, %c0_32] : memref<10x10x4xf32, #tpu.memory_space<vmem>>, vector<8x8x4xf32>
    %34 = vector.shape_cast %33 : vector<8x8x4xf32> to vector<64x4xf32>
    %35 = arith.truncf %34 : vector<64x4xf32> to vector<64x4xbf16>
    %c8 = arith.constant 8 : index
    %c0_33 = arith.constant 0 : index
    %36 = vector.load %arg3[%c8, %c0_33] : memref<36x8xbf16, #tpu.memory_space<vmem>>, vector<4x8xbf16>
    %cst_34 = arith.constant dense<0.000000e+00> : vector<64x8xf32>
    %37 = tpu.matmul %35, %36, %cst_34 {dimension_numbers = #tpu.dot_dimension_numbers<[1], [0], [0], [1], [0, 0, 1, 1], [], []>} : vector<64x4xbf16>, vector<4x8xbf16>, vector<64x8xf32> -> vector<64x8xf32>
    %38 = arith.addf %32, %37 : vector<64x8xf32>
    %c1_35 = arith.constant 1 : index
    %c0_36 = arith.constant 0 : index
    %c0_37 = arith.constant 0 : index
    %39 = vector.load %arg10[%c1_35, %c0_36, %c0_37] : memref<10x10x4xf32, #tpu.memory_space<vmem>>, vector<8x8x4xf32>
    %40 = vector.shape_cast %39 : vector<8x8x4xf32> to vector<64x4xf32>
    %41 = arith.truncf %40 : vector<64x4xf32> to vector<64x4xbf16>
    %c12 = arith.constant 12 : index
    %c0_38 = arith.constant 0 : index
    %42 = vector.load %arg3[%c12, %c0_38] : memref<36x8xbf16, #tpu.memory_space<vmem>>, vector<4x8xbf16>
    %cst_39 = arith.constant dense<0.000000e+00> : vector<64x8xf32>
    %43 = tpu.matmul %41, %42, %cst_39 {dimension_numbers = #tpu.dot_dimension_numbers<[1], [0], [0], [1], [0, 0, 1, 1], [], []>} : vector<64x4xbf16>, vector<4x8xbf16>, vector<64x8xf32> -> vector<64x8xf32>
    %44 = arith.addf %38, %43 : vector<64x8xf32>
    %c1_40 = arith.constant 1 : index
    %c1_41 = arith.constant 1 : index
    %c0_42 = arith.constant 0 : index
    %45 = vector.load %arg10[%c1_40, %c1_41, %c0_42] : memref<10x10x4xf32, #tpu.memory_space<vmem>>, vector<8x8x4xf32>
    %46 = vector.shape_cast %45 : vector<8x8x4xf32> to vector<64x4xf32>
    %47 = arith.truncf %46 : vector<64x4xf32> to vector<64x4xbf16>
    %c16 = arith.constant 16 : index
    %c0_43 = arith.constant 0 : index
    %48 = vector.load %arg3[%c16, %c0_43] : memref<36x8xbf16, #tpu.memory_space<vmem>>, vector<4x8xbf16>
    %cst_44 = arith.constant dense<0.000000e+00> : vector<64x8xf32>
    %49 = tpu.matmul %47, %48, %cst_44 {dimension_numbers = #tpu.dot_dimension_numbers<[1], [0], [0], [1], [0, 0, 1, 1], [], []>} : vector<64x4xbf16>, vector<4x8xbf16>, vector<64x8xf32> -> vector<64x8xf32>
    %50 = arith.addf %44, %49 : vector<64x8xf32>
    %c1_45 = arith.constant 1 : index
    %c2_46 = arith.constant 2 : index
    %c0_47 = arith.constant 0 : index
    %51 = vector.load %arg10[%c1_45, %c2_46, %c0_47] : memref<10x10x4xf32, #tpu.memory_space<vmem>>, vector<8x8x4xf32>
    %52 = vector.shape_cast %51 : vector<8x8x4xf32> to vector<64x4xf32>
    %53 = arith.truncf %52 : vector<64x4xf32> to vector<64x4xbf16>
    %c20 = arith.constant 20 : index
    %c0_48 = arith.constant 0 : index
    %54 = vector.load %arg3[%c20, %c0_48] : memref<36x8xbf16, #tpu.memory_space<vmem>>, vector<4x8xbf16>
    %cst_49 = arith.constant dense<0.000000e+00> : vector<64x8xf32>
    %55 = tpu.matmul %53, %54, %cst_49 {dimension_numbers = #tpu.dot_dimension_numbers<[1], [0], [0], [1], [0, 0, 1, 1], [], []>} : vector<64x4xbf16>, vector<4x8xbf16>, vector<64x8xf32> -> vector<64x8xf32>
    %56 = arith.addf %50, %55 : vector<64x8xf32>
    %c2_50 = arith.constant 2 : index
    %c0_51 = arith.constant 0 : index
    %c0_52 = arith.constant 0 : index
    %57 = vector.load %arg10[%c2_50, %c0_51, %c0_52] : memref<10x10x4xf32, #tpu.memory_space<vmem>>, vector<8x8x4xf32>
    %58 = vector.shape_cast %57 : vector<8x8x4xf32> to vector<64x4xf32>
    %59 = arith.truncf %58 : vector<64x4xf32> to vector<64x4xbf16>
    %c24 = arith.constant 24 : index
    %c0_53 = arith.constant 0 : index
    %60 = vector.load %arg3[%c24, %c0_53] : memref<36x8xbf16, #tpu.memory_space<vmem>>, vector<4x8xbf16>
    %cst_54 = arith.constant dense<0.000000e+00> : vector<64x8xf32>
    %61 = tpu.matmul %59, %60, %cst_54 {dimension_numbers = #tpu.dot_dimension_numbers<[1], [0], [0], [1], [0, 0, 1, 1], [], []>} : vector<64x4xbf16>, vector<4x8xbf16>, vector<64x8xf32> -> vector<64x8xf32>
    %62 = arith.addf %56, %61 : vector<64x8xf32>
    %c2_55 = arith.constant 2 : index
    %c1_56 = arith.constant 1 : index
    %c0_57 = arith.constant 0 : index
    %63 = vector.load %arg10[%c2_55, %c1_56, %c0_57] : memref<10x10x4xf32, #tpu.memory_space<vmem>>, vector<8x8x4xf32>
    %64 = vector.shape_cast %63 : vector<8x8x4xf32> to vector<64x4xf32>
    %65 = arith.truncf %64 : vector<64x4xf32> to vector<64x4xbf16>
    %c28 = arith.constant 28 : index
    %c0_58 = arith.constant 0 : index
    %66 = vector.load %arg3[%c28, %c0_58] : memref<36x8xbf16, #tpu.memory_space<vmem>>, vector<4x8xbf16>
    %cst_59 = arith.constant dense<0.000000e+00> : vector<64x8xf32>
    %67 = tpu.matmul %65, %66, %cst_59 {dimension_numbers = #tpu.dot_dimension_numbers<[1], [0], [0], [1], [0, 0, 1, 1], [], []>} : vector<64x4xbf16>, vector<4x8xbf16>, vector<64x8xf32> -> vector<64x8xf32>
    %68 = arith.addf %62, %67 : vector<64x8xf32>
    %c2_60 = arith.constant 2 : index
    %c2_61 = arith.constant 2 : index
    %c0_62 = arith.constant 0 : index
    %69 = vector.load %arg10[%c2_60, %c2_61, %c0_62] : memref<10x10x4xf32, #tpu.memory_space<vmem>>, vector<8x8x4xf32>
    %70 = vector.shape_cast %69 : vector<8x8x4xf32> to vector<64x4xf32>
    %71 = arith.truncf %70 : vector<64x4xf32> to vector<64x4xbf16>
    %c32 = arith.constant 32 : index
    %c0_63 = arith.constant 0 : index
    %72 = vector.load %arg3[%c32, %c0_63] : memref<36x8xbf16, #tpu.memory_space<vmem>>, vector<4x8xbf16>
    %cst_64 = arith.constant dense<0.000000e+00> : vector<64x8xf32>
    %73 = tpu.matmul %71, %72, %cst_64 {dimension_numbers = #tpu.dot_dimension_numbers<[1], [0], [0], [1], [0, 0, 1, 1], [], []>} : vector<64x4xbf16>, vector<4x8xbf16>, vector<64x8xf32> -> vector<64x8xf32>
    %74 = arith.addf %68, %73 : vector<64x8xf32>
    %c0_65 = arith.constant 0 : index
    %c0_66 = arith.constant 0 : index
    %75 = vector.load %arg5[%c0_65, %c0_66] : memref<1x8xf32, #tpu.memory_space<vmem>>, vector<1x8xf32>
    %76 = vector.broadcast %75 : vector<1x8xf32> to vector<64x8xf32>
    %77 = arith.mulf %74, %76 : vector<64x8xf32>
    %c0_67 = arith.constant 0 : index
    %c0_68 = arith.constant 0 : index
    %78 = vector.load %arg6[%c0_67, %c0_68] : memref<1x8xf32, #tpu.memory_space<vmem>>, vector<1x8xf32>
    %79 = vector.broadcast %78 : vector<1x8xf32> to vector<64x8xf32>
    %80 = arith.addf %77, %79 : vector<64x8xf32>
    %cst_69 = arith.constant 0.000000e+00 : f32
    %81 = vector.broadcast %cst_69 : f32 to vector<64x8xf32>
    %82 = arith.maximumf %80, %81 : vector<64x8xf32>
    %cst_70 = arith.constant 0.000000e+00 : f32
    %83 = vector.broadcast %cst_70 : f32 to vector<1x10x8xf32>
    %c0_71 = arith.constant 0 : index
    %c0_72 = arith.constant 0 : index
    %c0_73 = arith.constant 0 : index
    %84 = vector.load %arg11[%c0_71, %c0_72, %c0_73] : memref<10x10x8xf32, #tpu.memory_space<vmem>>, vector<1x10x8xf32>
    tpu.vector_store %arg11[%c0_71, %c0_72, %c0_73], %83 {strides = array<i32>} : memref<10x10x8xf32, #tpu.memory_space<vmem>>, vector<1x10x8xf32>,
    %cst_74 = arith.constant 0.000000e+00 : f32
    %85 = vector.broadcast %cst_74 : f32 to vector<1x10x8xf32>
    %c9_75 = arith.constant 9 : index
    %c0_76 = arith.constant 0 : index
    %c0_77 = arith.constant 0 : index
    %86 = vector.load %arg11[%c9_75, %c0_76, %c0_77] : memref<10x10x8xf32, #tpu.memory_space<vmem>>, vector<1x10x8xf32>
    tpu.vector_store %arg11[%c9_75, %c0_76, %c0_77], %85 {strides = array<i32>} : memref<10x10x8xf32, #tpu.memory_space<vmem>>, vector<1x10x8xf32>,
    %cst_78 = arith.constant 0.000000e+00 : f32
    %87 = vector.broadcast %cst_78 : f32 to vector<10x1x8xf32>
    %c0_79 = arith.constant 0 : index
    %c0_80 = arith.constant 0 : index
    %c0_81 = arith.constant 0 : index
    %88 = vector.load %arg11[%c0_79, %c0_80, %c0_81] : memref<10x10x8xf32, #tpu.memory_space<vmem>>, vector<10x1x8xf32>
    tpu.vector_store %arg11[%c0_79, %c0_80, %c0_81], %87 {strides = array<i32>} : memref<10x10x8xf32, #tpu.memory_space<vmem>>, vector<10x1x8xf32>,
    %cst_82 = arith.constant 0.000000e+00 : f32
    %89 = vector.broadcast %cst_82 : f32 to vector<10x1x8xf32>
    %c0_83 = arith.constant 0 : index
    %c9_84 = arith.constant 9 : index
    %c0_85 = arith.constant 0 : index
    %90 = vector.load %arg11[%c0_83, %c9_84, %c0_85] : memref<10x10x8xf32, #tpu.memory_space<vmem>>, vector<10x1x8xf32>
    tpu.vector_store %arg11[%c0_83, %c9_84, %c0_85], %89 {strides = array<i32>} : memref<10x10x8xf32, #tpu.memory_space<vmem>>, vector<10x1x8xf32>,
    %91 = vector.shape_cast %82 : vector<64x8xf32> to vector<8x8x8xf32>
    %c1_86 = arith.constant 1 : index
    %c1_87 = arith.constant 1 : index
    %c0_88 = arith.constant 0 : index
    %92 = vector.load %arg11[%c1_86, %c1_87, %c0_88] : memref<10x10x8xf32, #tpu.memory_space<vmem>>, vector<8x8x8xf32>
    tpu.vector_store %arg11[%c1_86, %c1_87, %c0_88], %91 {strides = array<i32>} : memref<10x10x8xf32, #tpu.memory_space<vmem>>, vector<8x8x8xf32>,
    %cst_89 = arith.constant 0.000000e+00 : f32
    %93 = vector.broadcast %cst_89 : f32 to vector<64x8xf32>
    %c0_90 = arith.constant 0 : index
    %c0_91 = arith.constant 0 : index
    %c0_92 = arith.constant 0 : index
    %94 = vector.load %arg11[%c0_90, %c0_91, %c0_92] : memref<10x10x8xf32, #tpu.memory_space<vmem>>, vector<8x8x8xf32>
    %95 = vector.shape_cast %94 : vector<8x8x8xf32> to vector<64x8xf32>
    %96 = arith.truncf %95 : vector<64x8xf32> to vector<64x8xbf16>
    %c0_93 = arith.constant 0 : index
    %c0_94 = arith.constant 0 : index
    %97 = vector.load %arg4[%c0_93, %c0_94] : memref<72x8xbf16, #tpu.memory_space<vmem>>, vector<8x8xbf16>
    %cst_95 = arith.constant dense<0.000000e+00> : vector<64x8xf32>
    %98 = tpu.matmul %96, %97, %cst_95 {dimension_numbers = #tpu.dot_dimension_numbers<[1], [0], [0], [1], [0, 0, 1, 1], [], []>} : vector<64x8xbf16>, vector<8x8xbf16>, vector<64x8xf32> -> vector<64x8xf32>
    %99 = arith.addf %93, %98 : vector<64x8xf32>
    %c0_96 = arith.constant 0 : index
    %c1_97 = arith.constant 1 : index
    %c0_98 = arith.constant 0 : index
    %100 = vector.load %arg11[%c0_96, %c1_97, %c0_98] : memref<10x10x8xf32, #tpu.memory_space<vmem>>, vector<8x8x8xf32>
    %101 = vector.shape_cast %100 : vector<8x8x8xf32> to vector<64x8xf32>
    %102 = arith.truncf %101 : vector<64x8xf32> to vector<64x8xbf16>
    %c8_99 = arith.constant 8 : index
    %c0_100 = arith.constant 0 : index
    %103 = vector.load %arg4[%c8_99, %c0_100] : memref<72x8xbf16, #tpu.memory_space<vmem>>, vector<8x8xbf16>
    %cst_101 = arith.constant dense<0.000000e+00> : vector<64x8xf32>
    %104 = tpu.matmul %102, %103, %cst_101 {dimension_numbers = #tpu.dot_dimension_numbers<[1], [0], [0], [1], [0, 0, 1, 1], [], []>} : vector<64x8xbf16>, vector<8x8xbf16>, vector<64x8xf32> -> vector<64x8xf32>
    %105 = arith.addf %99, %104 : vector<64x8xf32>
    %c0_102 = arith.constant 0 : index
    %c2_103 = arith.constant 2 : index
    %c0_104 = arith.constant 0 : index
    %106 = vector.load %arg11[%c0_102, %c2_103, %c0_104] : memref<10x10x8xf32, #tpu.memory_space<vmem>>, vector<8x8x8xf32>
    %107 = vector.shape_cast %106 : vector<8x8x8xf32> to vector<64x8xf32>
    %108 = arith.truncf %107 : vector<64x8xf32> to vector<64x8xbf16>
    %c16_105 = arith.constant 16 : index
    %c0_106 = arith.constant 0 : index
    %109 = vector.load %arg4[%c16_105, %c0_106] : memref<72x8xbf16, #tpu.memory_space<vmem>>, vector<8x8xbf16>
    %cst_107 = arith.constant dense<0.000000e+00> : vector<64x8xf32>
    %110 = tpu.matmul %108, %109, %cst_107 {dimension_numbers = #tpu.dot_dimension_numbers<[1], [0], [0], [1], [0, 0, 1, 1], [], []>} : vector<64x8xbf16>, vector<8x8xbf16>, vector<64x8xf32> -> vector<64x8xf32>
    %111 = arith.addf %105, %110 : vector<64x8xf32>
    %c1_108 = arith.constant 1 : index
    %c0_109 = arith.constant 0 : index
    %c0_110 = arith.constant 0 : index
    %112 = vector.load %arg11[%c1_108, %c0_109, %c0_110] : memref<10x10x8xf32, #tpu.memory_space<vmem>>, vector<8x8x8xf32>
    %113 = vector.shape_cast %112 : vector<8x8x8xf32> to vector<64x8xf32>
    %114 = arith.truncf %113 : vector<64x8xf32> to vector<64x8xbf16>
    %c24_111 = arith.constant 24 : index
    %c0_112 = arith.constant 0 : index
    %115 = vector.load %arg4[%c24_111, %c0_112] : memref<72x8xbf16, #tpu.memory_space<vmem>>, vector<8x8xbf16>
    %cst_113 = arith.constant dense<0.000000e+00> : vector<64x8xf32>
    %116 = tpu.matmul %114, %115, %cst_113 {dimension_numbers = #tpu.dot_dimension_numbers<[1], [0], [0], [1], [0, 0, 1, 1], [], []>} : vector<64x8xbf16>, vector<8x8xbf16>, vector<64x8xf32> -> vector<64x8xf32>
    %117 = arith.addf %111, %116 : vector<64x8xf32>
    %c1_114 = arith.constant 1 : index
    %c1_115 = arith.constant 1 : index
    %c0_116 = arith.constant 0 : index
    %118 = vector.load %arg11[%c1_114, %c1_115, %c0_116] : memref<10x10x8xf32, #tpu.memory_space<vmem>>, vector<8x8x8xf32>
    %119 = vector.shape_cast %118 : vector<8x8x8xf32> to vector<64x8xf32>
    %120 = arith.truncf %119 : vector<64x8xf32> to vector<64x8xbf16>
    %c32_117 = arith.constant 32 : index
    %c0_118 = arith.constant 0 : index
    %121 = vector.load %arg4[%c32_117, %c0_118] : memref<72x8xbf16, #tpu.memory_space<vmem>>, vector<8x8xbf16>
    %cst_119 = arith.constant dense<0.000000e+00> : vector<64x8xf32>
    %122 = tpu.matmul %120, %121, %cst_119 {dimension_numbers = #tpu.dot_dimension_numbers<[1], [0], [0], [1], [0, 0, 1, 1], [], []>} : vector<64x8xbf16>, vector<8x8xbf16>, vector<64x8xf32> -> vector<64x8xf32>
    %123 = arith.addf %117, %122 : vector<64x8xf32>
    %c1_120 = arith.constant 1 : index
    %c2_121 = arith.constant 2 : index
    %c0_122 = arith.constant 0 : index
    %124 = vector.load %arg11[%c1_120, %c2_121, %c0_122] : memref<10x10x8xf32, #tpu.memory_space<vmem>>, vector<8x8x8xf32>
    %125 = vector.shape_cast %124 : vector<8x8x8xf32> to vector<64x8xf32>
    %126 = arith.truncf %125 : vector<64x8xf32> to vector<64x8xbf16>
    %c40 = arith.constant 40 : index
    %c0_123 = arith.constant 0 : index
    %127 = vector.load %arg4[%c40, %c0_123] : memref<72x8xbf16, #tpu.memory_space<vmem>>, vector<8x8xbf16>
    %cst_124 = arith.constant dense<0.000000e+00> : vector<64x8xf32>
    %128 = tpu.matmul %126, %127, %cst_124 {dimension_numbers = #tpu.dot_dimension_numbers<[1], [0], [0], [1], [0, 0, 1, 1], [], []>} : vector<64x8xbf16>, vector<8x8xbf16>, vector<64x8xf32> -> vector<64x8xf32>
    %129 = arith.addf %123, %128 : vector<64x8xf32>
    %c2_125 = arith.constant 2 : index
    %c0_126 = arith.constant 0 : index
    %c0_127 = arith.constant 0 : index
    %130 = vector.load %arg11[%c2_125, %c0_126, %c0_127] : memref<10x10x8xf32, #tpu.memory_space<vmem>>, vector<8x8x8xf32>
    %131 = vector.shape_cast %130 : vector<8x8x8xf32> to vector<64x8xf32>
    %132 = arith.truncf %131 : vector<64x8xf32> to vector<64x8xbf16>
    %c48 = arith.constant 48 : index
    %c0_128 = arith.constant 0 : index
    %133 = vector.load %arg4[%c48, %c0_128] : memref<72x8xbf16, #tpu.memory_space<vmem>>, vector<8x8xbf16>
    %cst_129 = arith.constant dense<0.000000e+00> : vector<64x8xf32>
    %134 = tpu.matmul %132, %133, %cst_129 {dimension_numbers = #tpu.dot_dimension_numbers<[1], [0], [0], [1], [0, 0, 1, 1], [], []>} : vector<64x8xbf16>, vector<8x8xbf16>, vector<64x8xf32> -> vector<64x8xf32>
    %135 = arith.addf %129, %134 : vector<64x8xf32>
    %c2_130 = arith.constant 2 : index
    %c1_131 = arith.constant 1 : index
    %c0_132 = arith.constant 0 : index
    %136 = vector.load %arg11[%c2_130, %c1_131, %c0_132] : memref<10x10x8xf32, #tpu.memory_space<vmem>>, vector<8x8x8xf32>
    %137 = vector.shape_cast %136 : vector<8x8x8xf32> to vector<64x8xf32>
    %138 = arith.truncf %137 : vector<64x8xf32> to vector<64x8xbf16>
    %c56 = arith.constant 56 : index
    %c0_133 = arith.constant 0 : index
    %139 = vector.load %arg4[%c56, %c0_133] : memref<72x8xbf16, #tpu.memory_space<vmem>>, vector<8x8xbf16>
    %cst_134 = arith.constant dense<0.000000e+00> : vector<64x8xf32>
    %140 = tpu.matmul %138, %139, %cst_134 {dimension_numbers = #tpu.dot_dimension_numbers<[1], [0], [0], [1], [0, 0, 1, 1], [], []>} : vector<64x8xbf16>, vector<8x8xbf16>, vector<64x8xf32> -> vector<64x8xf32>
    %141 = arith.addf %135, %140 : vector<64x8xf32>
    %c2_135 = arith.constant 2 : index
    %c2_136 = arith.constant 2 : index
    %c0_137 = arith.constant 0 : index
    %142 = vector.load %arg11[%c2_135, %c2_136, %c0_137] : memref<10x10x8xf32, #tpu.memory_space<vmem>>, vector<8x8x8xf32>
    %143 = vector.shape_cast %142 : vector<8x8x8xf32> to vector<64x8xf32>
    %144 = arith.truncf %143 : vector<64x8xf32> to vector<64x8xbf16>
    %c64 = arith.constant 64 : index
    %c0_138 = arith.constant 0 : index
    %145 = vector.load %arg4[%c64, %c0_138] : memref<72x8xbf16, #tpu.memory_space<vmem>>, vector<8x8xbf16>
    %cst_139 = arith.constant dense<0.000000e+00> : vector<64x8xf32>
    %146 = tpu.matmul %144, %145, %cst_139 {dimension_numbers = #tpu.dot_dimension_numbers<[1], [0], [0], [1], [0, 0, 1, 1], [], []>} : vector<64x8xbf16>, vector<8x8xbf16>, vector<64x8xf32> -> vector<64x8xf32>
    %147 = arith.addf %141, %146 : vector<64x8xf32>
    %c0_140 = arith.constant 0 : index
    %c0_141 = arith.constant 0 : index
    %148 = vector.load %arg7[%c0_140, %c0_141] : memref<1x8xf32, #tpu.memory_space<vmem>>, vector<1x8xf32>
    %149 = vector.broadcast %148 : vector<1x8xf32> to vector<64x8xf32>
    %150 = arith.mulf %147, %149 : vector<64x8xf32>
    %c0_142 = arith.constant 0 : index
    %c0_143 = arith.constant 0 : index
    %151 = vector.load %arg8[%c0_142, %c0_143] : memref<1x8xf32, #tpu.memory_space<vmem>>, vector<1x8xf32>
    %152 = vector.broadcast %151 : vector<1x8xf32> to vector<64x8xf32>
    %153 = arith.addf %150, %152 : vector<64x8xf32>
    %cst_144 = arith.constant 0.000000e+00 : f32
    %154 = vector.broadcast %cst_144 : f32 to vector<64x8xf32>
    %155 = arith.maximumf %153, %154 : vector<64x8xf32>
    %c0_145 = arith.constant 0 : index
    %c0_146 = arith.constant 0 : index
    %c0_147 = arith.constant 0 : index
    %156 = vector.load %arg2[%c0_145, %c0_146, %c0_147] : memref<1x1x8xf32, #tpu.memory_space<vmem>>, vector<1x1x8xf32>
    %157 = vector.shape_cast %156 : vector<1x1x8xf32> to vector<1x8xf32>
    %158 = vector.broadcast %157 : vector<1x8xf32> to vector<64x8xf32>
    %159 = arith.addf %155, %158 : vector<64x8xf32>
    %c0_148 = arith.constant 0 : index
    %c0_149 = arith.constant 0 : index
    %c0_150 = arith.constant 0 : index
    %160 = vector.load %arg9[%c0_148, %c0_149, %c0_150] : memref<1x64x8xf32, #tpu.memory_space<vmem>>, vector<1x64x8xf32>
    %161 = vector.shape_cast %160 : vector<1x64x8xf32> to vector<64x8xf32>
    %162 = vector.shape_cast %159 : vector<64x8xf32> to vector<1x64x8xf32>
    tpu.vector_store %arg9[%c0_148, %c0_149, %c0_150], %162 {strides = array<i32>} : memref<1x64x8xf32, #tpu.memory_space<vmem>>, vector<1x64x8xf32>,
    return
  }
  func.func @transform_0(%arg0: i32) -> (i32, i32, i32, i32) {
    %c0_i32 = arith.constant 0 : i32
    %c0_i32_0 = arith.constant 0 : i32
    %c0_i32_1 = arith.constant 0 : i32
    %c0_i32_2 = arith.constant 0 : i32
    return %arg0, %c0_i32, %c0_i32_0, %c0_i32_1 : i32, i32, i32, i32
  }
  func.func @transform_1(%arg0: i32) -> (i32, i32, i32) {
    %c0_i32 = arith.constant 0 : i32
    %c0_i32_0 = arith.constant 0 : i32
    %c0_i32_1 = arith.constant 0 : i32
    return %arg0, %c0_i32, %c0_i32_0 : i32, i32, i32
  }
  func.func @transform_2(%arg0: i32) -> (i32, i32) {
    %c0_i32 = arith.constant 0 : i32
    %c0_i32_0 = arith.constant 0 : i32
    %c0_i32_1 = arith.constant 0 : i32
    return %c0_i32, %c0_i32_0 : i32, i32
  }
  func.func @transform_3(%arg0: i32) -> (i32, i32) {
    %c0_i32 = arith.constant 0 : i32
    %c0_i32_0 = arith.constant 0 : i32
    %c0_i32_1 = arith.constant 0 : i32
    return %c0_i32, %c0_i32_0 : i32, i32
  }
  func.func @transform_4(%arg0: i32) -> (i32, i32) {
    %c0_i32 = arith.constant 0 : i32
    %c0_i32_0 = arith.constant 0 : i32
    %c0_i32_1 = arith.constant 0 : i32
    return %c0_i32, %c0_i32_0 : i32, i32
  }
  func.func @transform_5(%arg0: i32) -> (i32, i32) {
    %c0_i32 = arith.constant 0 : i32
    %c0_i32_0 = arith.constant 0 : i32
    %c0_i32_1 = arith.constant 0 : i32
    return %c0_i32, %c0_i32_0 : i32, i32
  }
  func.func @transform_6(%arg0: i32) -> (i32, i32) {
    %c0_i32 = arith.constant 0 : i32
    %c0_i32_0 = arith.constant 0 : i32
    %c0_i32_1 = arith.constant 0 : i32
    return %c0_i32, %c0_i32_0 : i32, i32
  }
  func.func @transform_7(%arg0: i32) -> (i32, i32) {
    %c0_i32 = arith.constant 0 : i32
    %c0_i32_0 = arith.constant 0 : i32
    %c0_i32_1 = arith.constant 0 : i32
    return %c0_i32, %c0_i32_0 : i32, i32
  }
  func.func @transform_8(%arg0: i32) -> (i32, i32, i32) {
    %c0_i32 = arith.constant 0 : i32
    %c0_i32_0 = arith.constant 0 : i32
    %c0_i32_1 = arith.constant 0 : i32
    return %arg0, %c0_i32, %c0_i32_0 : i32, i32, i32
  }
}

</mosaic_0001>

<llo_original>
// kernel: downsample_forward.1
$region0: #{downsample_forward.1}
  #allocation0 [shape = 'u32[]', space=smem, size = 0x4, offset = 0x4, fixed_abs, tag = 'smem constant byte address 0x4 - core index']
  #allocation1 [shape = 'u32[144,128]{1,0:T(1,128)}', space=vmem, size = 0x12000, scoped, tag = 'internal scratch']
  #allocation2 [shape = 'f32[10,10,4]{2,1,0:T(8,128)}', space=vmem, size = 0x14000, scoped, tag = 'scratch operand']
  #allocation3 [shape = 'f32[10,10,8]{2,1,0:T(8,128)}', space=vmem, size = 0x14000, scoped, tag = 'scratch operand']
  %s0 = inlined_call_operand.vmem [shape: f32[2,16,8,8], index: 0, kind: input, shape index: {}]
  %s1 = inlined_call_operand.vmem [shape: f32[2,1,8], index: 1, kind: input, shape index: {}]
  %s2 = inlined_call_operand.vmem [shape: bf16[36,8], index: 2, kind: input, shape index: {}]
  %s3 = inlined_call_operand.vmem [shape: bf16[72,8], index: 3, kind: input, shape index: {}]
  %s4 = inlined_call_operand.vmem [shape: f32[1,8], index: 4, kind: input, shape index: {}]
  %s5 = inlined_call_operand.vmem [shape: f32[1,8], index: 5, kind: input, shape index: {}]
  %s6 = inlined_call_operand.vmem [shape: f32[1,8], index: 6, kind: input, shape index: {}]
  %s7 = inlined_call_operand.vmem [shape: f32[1,8], index: 7, kind: input, shape index: {}]
  %s8 = inlined_call_operand.vmem [shape: f32[2,64,8], index: 8, kind: output, shape index: {}]
  %s9 = sld [smem:[#allocation0]]
  $region65: #{downsample_forward.1} parent=0
    _
  %s11 = ssub.s32 1, %s9
  %s12 = scalar_select 0, %s11, %s9
  loop: start=0, step=1, limit=4
  $region2: #{downsample_forward.1} parent=0 // loop_pre_header
    _
  $region3: #{downsample_forward.1} parent=0 // loop_header
    %s14 = sphi 0, %s18
    %p15 = scmp.ge.s32.totalorder %s14, 4
    %s24 = sphi 0, %s26
    %s27 = sphi 0, %s24
    %s28 = sphi 0, %s27
    %s44 = sphi 0, %s28
    %s50 = sphi 0, %s52
    %s53 = sphi 0, %s50
    %s54 = sphi 0, %s53
    %s70 = sphi 0, %s54
    %s74 = sphi 0, %s74
    %s76 = sphi 0, %s74
    %s77 = sphi 0, %s76
    %s91 = sphi 0, %s77
    %s95 = sphi 0, %s95
    %s97 = sphi 0, %s95
    %s98 = sphi 0, %s97
    %s112 = sphi 0, %s98
    %s116 = sphi 0, %s116
    %s118 = sphi 0, %s116
    %s119 = sphi 0, %s118
    %s133 = sphi 0, %s119
    %s137 = sphi 0, %s137
    %s139 = sphi 0, %s137
    %s140 = sphi 0, %s139
    %s154 = sphi 0, %s140
    %s158 = sphi 0, %s158
    %s160 = sphi 0, %s158
    %s161 = sphi 0, %s160
    %s175 = sphi 0, %s161
    %s179 = sphi 0, %s179
    %s181 = sphi 0, %s179
    %s182 = sphi 0, %s181
    %s196 = sphi 0, %s182
    %s202 = sphi 0, %s204
    %s205 = sphi 0, %s202
    %s206 = sphi 0, %s205
    %s222 = sphi 0, %s206
  $region4: #{downsample_forward.1} parent=0 // loop_header_branch
    %17 = sbr.rel (%p15) target = $region8
  $region5: #{downsample_forward.1} parent=0 // loop_body
    %s19 = ssub.s32 %s14, 1
    %s20 = ssub.s32 %s14, 2
    %s21 = sadd.s32 %s14, 1
    %s22 = ssub.s32 %s14, %s21
    %p23 = scmp.eq.s32.totalorder %s22, 0
    %s25 = sadd.s32 %s24, 1
    %s26 = scalar_select %p23, %s24, %s25
    %p29 = pneg %p23
    %p30 = scmp.eq.s32.totalorder %s14, 1
    %p31 = por %p29, %p30
    %p32 = scmp.ne.s32.totalorder %s24, %s27
    %p33 = scmp.eq.s32.totalorder %s14, 0
    %p34 = por %p32, %p33
    %p35 = scmp.ne.s32.totalorder %s24, %s27
    %p36 = scmp.eq.s32.totalorder %s19, 1
    %p37 = por %p35, %p36
    %p38 = scmp.ne.s32.totalorder %s27, %s28
    %p39 = scmp.eq.s32.totalorder %s19, 0
    %p40 = por %p38, %p39
    %p41 = scmp.ne.s32.totalorder %s27, %s28
    %p42 = scmp.eq.s32.totalorder %s20, 1
    %p43 = por %p41, %p42
    %p45 = scmp.ne.s32.totalorder %s28, %s44
    %p46 = scmp.eq.s32.totalorder %s20, 0
    %p47 = por %p45, %p46
    %s48 = ssub.s32 %s14, %s21
    %p49 = scmp.eq.s32.totalorder %s48, 0
    %s51 = sadd.s32 %s50, 1
    %s52 = scalar_select %p49, %s50, %s51
    %p55 = pneg %p49
    %p56 = scmp.eq.s32.totalorder %s14, 1
    %p57 = por %p55, %p56
    %p58 = scmp.ne.s32.totalorder %s50, %s53
    %p59 = scmp.eq.s32.totalorder %s14, 0
    %p60 = por %p58, %p59
    %p61 = scmp.ne.s32.totalorder %s50, %s53
    %p62 = scmp.eq.s32.totalorder %s19, 1
    %p63 = por %p61, %p62
    %p64 = scmp.ne.s32.totalorder %s53, %s54
    %p65 = scmp.eq.s32.totalorder %s19, 0
    %p66 = por %p64, %p65
    %p67 = scmp.ne.s32.totalorder %s53, %s54
    %p68 = scmp.eq.s32.totalorder %s20, 1
    %p69 = por %p67, %p68
    %p71 = scmp.ne.s32.totalorder %s54, %s70
    %p72 = scmp.eq.s32.totalorder %s20, 0
    %p73 = por %p71, %p72
    %s75 = sadd.s32 %s74, 1
    %p78 = scmp.eq.s32.totalorder %s14, 1
    %p79 = scmp.ne.s32.totalorder %s74, %s76
    %p80 = scmp.eq.s32.totalorder %s14, 0
    %p81 = por %p79, %p80
    %p82 = scmp.ne.s32.totalorder %s74, %s76
    %p83 = scmp.eq.s32.totalorder %s19, 1
    %p84 = por %p82, %p83
    %p85 = scmp.ne.s32.totalorder %s76, %s77
    %p86 = scmp.eq.s32.totalorder %s19, 0
    %p87 = por %p85, %p86
    %p88 = scmp.ne.s32.totalorder %s76, %s77
    %p89 = scmp.eq.s32.totalorder %s20, 1
    %p90 = por %p88, %p89
    %p92 = scmp.ne.s32.totalorder %s77, %s91
    %p93 = scmp.eq.s32.totalorder %s20, 0
    %p94 = por %p92, %p93
    %s96 = sadd.s32 %s95, 1
    %p99 = scmp.eq.s32.totalorder %s14, 1
    %p100 = scmp.ne.s32.totalorder %s95, %s97
    %p101 = scmp.eq.s32.totalorder %s14, 0
    %p102 = por %p100, %p101
    %p103 = scmp.ne.s32.totalorder %s95, %s97
    %p104 = scmp.eq.s32.totalorder %s19, 1
    %p105 = por %p103, %p104
    %p106 = scmp.ne.s32.totalorder %s97, %s98
    %p107 = scmp.eq.s32.totalorder %s19, 0
    %p108 = por %p106, %p107
    %p109 = scmp.ne.s32.totalorder %s97, %s98
    %p110 = scmp.eq.s32.totalorder %s20, 1
    %p111 = por %p109, %p110
    %p113 = scmp.ne.s32.totalorder %s98, %s112
    %p114 = scmp.eq.s32.totalorder %s20, 0
    %p115 = por %p113, %p114
    %s117 = sadd.s32 %s116, 1
    %p120 = scmp.eq.s32.totalorder %s14, 1
    %p121 = scmp.ne.s32.totalorder %s116, %s118
    %p122 = scmp.eq.s32.totalorder %s14, 0
    %p123 = por %p121, %p122
    %p124 = scmp.ne.s32.totalorder %s116, %s118
    %p125 = scmp.eq.s32.totalorder %s19, 1
    %p126 = por %p124, %p125
    %p127 = scmp.ne.s32.totalorder %s118, %s119
    %p128 = scmp.eq.s32.totalorder %s19, 0
    %p129 = por %p127, %p128
    %p130 = scmp.ne.s32.totalorder %s118, %s119
    %p131 = scmp.eq.s32.totalorder %s20, 1
    %p132 = por %p130, %p131
    %p134 = scmp.ne.s32.totalorder %s119, %s133
    %p135 = scmp.eq.s32.totalorder %s20, 0
    %p136 = por %p134, %p135
    %s138 = sadd.s32 %s137, 1
    %p141 = scmp.eq.s32.totalorder %s14, 1
    %p142 = scmp.ne.s32.totalorder %s137, %s139
    %p143 = scmp.eq.s32.totalorder %s14, 0
    %p144 = por %p142, %p143
    %p145 = scmp.ne.s32.totalorder %s137, %s139
    %p146 = scmp.eq.s32.totalorder %s19, 1
    %p147 = por %p145, %p146
    %p148 = scmp.ne.s32.totalorder %s139, %s140
    %p149 = scmp.eq.s32.totalorder %s19, 0
    %p150 = por %p148, %p149
    %p151 = scmp.ne.s32.totalorder %s139, %s140
    %p152 = scmp.eq.s32.totalorder %s20, 1
    %p153 = por %p151, %p152
    %p155 = scmp.ne.s32.totalorder %s140, %s154
    %p156 = scmp.eq.s32.totalorder %s20, 0
    %p157 = por %p155, %p156
    %s159 = sadd.s32 %s158, 1
    %p162 = scmp.eq.s32.totalorder %s14, 1
    %p163 = scmp.ne.s32.totalorder %s158, %s160
    %p164 = scmp.eq.s32.totalorder %s14, 0
    %p165 = por %p163, %p164
    %p166 = scmp.ne.s32.totalorder %s158, %s160
    %p167 = scmp.eq.s32.totalorder %s19, 1
    %p168 = por %p166, %p167
    %p169 = scmp.ne.s32.totalorder %s160, %s161
    %p170 = scmp.eq.s32.totalorder %s19, 0
    %p171 = por %p169, %p170
    %p172 = scmp.ne.s32.totalorder %s160, %s161
    %p173 = scmp.eq.s32.totalorder %s20, 1
    %p174 = por %p172, %p173
    %p176 = scmp.ne.s32.totalorder %s161, %s175
    %p177 = scmp.eq.s32.totalorder %s20, 0
    %p178 = por %p176, %p177
    %s180 = sadd.s32 %s179, 1
    %p183 = scmp.eq.s32.totalorder %s14, 1
    %p184 = scmp.ne.s32.totalorder %s179, %s181
    %p185 = scmp.eq.s32.totalorder %s14, 0
    %p186 = por %p184, %p185
    %p187 = scmp.ne.s32.totalorder %s179, %s181
    %p188 = scmp.eq.s32.totalorder %s19, 1
    %p189 = por %p187, %p188
    %p190 = scmp.ne.s32.totalorder %s181, %s182
    %p191 = scmp.eq.s32.totalorder %s19, 0
    %p192 = por %p190, %p191
    %p193 = scmp.ne.s32.totalorder %s181, %s182
    %p194 = scmp.eq.s32.totalorder %s20, 1
    %p195 = por %p193, %p194
    %p197 = scmp.ne.s32.totalorder %s182, %s196
    %p198 = scmp.eq.s32.totalorder %s20, 0
    %p199 = por %p197, %p198
    %s200 = ssub.s32 %s14, %s21
    %p201 = scmp.eq.s32.totalorder %s200, 0
    %s203 = sadd.s32 %s202, 1
    %s204 = scalar_select %p201, %s202, %s203
    %p207 = pneg %p201
    %p208 = scmp.eq.s32.totalorder %s14, 1
    %p209 = por %p207, %p208
    %p210 = scmp.ne.s32.totalorder %s202, %s205
    %p211 = scmp.eq.s32.totalorder %s14, 0
    %p212 = por %p210, %p211
    %p213 = scmp.ne.s32.totalorder %s202, %s205
    %p214 = scmp.eq.s32.totalorder %s19, 1
    %p215 = por %p213, %p214
    %p216 = scmp.ne.s32.totalorder %s205, %s206
    %p217 = scmp.eq.s32.totalorder %s19, 0
    %p218 = por %p216, %p217
    %p219 = scmp.ne.s32.totalorder %s205, %s206
    %p220 = scmp.eq.s32.totalorder %s20, 1
    %p221 = por %p219, %p220
    %p223 = scmp.ne.s32.totalorder %s206, %s222
    %p224 = scmp.eq.s32.totalorder %s20, 0
    %p225 = por %p223, %p224
    %p226 = scmp.le.s32.totalorder 1, %s14
    %p227 = scmp.lt.s32.totalorder %s14, 3
    %p228 = pnand %p226, %p227
    %p229 = pneg %p228
    // Predicated region
    $region9: #{downsample_forward.1} parent=5 // pred_check
      _
    $region10: #{downsample_forward.1} parent=5 // pred_check_branch
      %231 = sbr.rel (%p228) target = $region12
    $region11: #{downsample_forward.1} parent=5 // pred_region
      %s232 = ssub.s32 %s14, 1
      // Predicated region
      $region13: #{downsample_forward.1} parent=11 // pred_check
        %p233 = pneg %p87
      $region14: #{downsample_forward.1} parent=11 // pred_check_branch
        %235 = sbr.rel (%p233) target = $region16
      $region15: #{downsample_forward.1} parent=11 // pred_region
        _
      $region16: #{downsample_forward.1} parent=11 // pred_fallthru
        _
      // Predicated region
      $region17: #{downsample_forward.1} parent=11 // pred_check
        %p236 = pneg %p108
      $region18: #{downsample_forward.1} parent=11 // pred_check_branch
        %238 = sbr.rel (%p236) target = $region20
      $region19: #{downsample_forward.1} parent=11 // pred_region
        _
      $region20: #{downsample_forward.1} parent=11 // pred_fallthru
        _
      // Predicated region
      $region21: #{downsample_forward.1} parent=11 // pred_check
        %p239 = pneg %p129
      $region22: #{downsample_forward.1} parent=11 // pred_check_branch
        %241 = sbr.rel (%p239) target = $region24
      $region23: #{downsample_forward.1} parent=11 // pred_region
        _
      $region24: #{downsample_forward.1} parent=11 // pred_fallthru
        _
      // Predicated region
      $region25: #{downsample_forward.1} parent=11 // pred_check
        %p242 = pneg %p150
      $region26: #{downsample_forward.1} parent=11 // pred_check_branch
        %244 = sbr.rel (%p242) target = $region28
      $region27: #{downsample_forward.1} parent=11 // pred_region
        _
      $region28: #{downsample_forward.1} parent=11 // pred_fallthru
        _
      // Predicated region
      $region29: #{downsample_forward.1} parent=11 // pred_check
        %p245 = pneg %p171
      $region30: #{downsample_forward.1} parent=11 // pred_check_branch
        %247 = sbr.rel (%p245) target = $region32
      $region31: #{downsample_forward.1} parent=11 // pred_region
        _
      $region32: #{downsample_forward.1} parent=11 // pred_fallthru
        _
      // Predicated region
      $region33: #{downsample_forward.1} parent=11 // pred_check
        %p248 = pneg %p192
      $region34: #{downsample_forward.1} parent=11 // pred_check_branch
        %250 = sbr.rel (%p248) target = $region36
      $region35: #{downsample_forward.1} parent=11 // pred_region
        _
      $region36: #{downsample_forward.1} parent=11 // pred_fallthru
        _
    $region12: #{downsample_forward.1} parent=5 // pred_fallthru
      _
    %p251 = scmp.lt.s32.totalorder %s14, 2
    // Predicated region
    $region37: #{downsample_forward.1} parent=5 // pred_check
      %p252 = pneg %p251
    $region38: #{downsample_forward.1} parent=5 // pred_check_branch
      %254 = sbr.rel (%p252) target = $region40
    $region39: #{downsample_forward.1} parent=5 // pred_region
      // Predicated region
      $region41: #{downsample_forward.1} parent=39 // pred_check
        %p255 = pneg %p34
      $region42: #{downsample_forward.1} parent=39 // pred_check_branch
        %257 = sbr.rel (%p255) target = $region44
      $region43: #{downsample_forward.1} parent=39 // pred_region
        %p258 = scmp.lt.s32.totalorder %s14, 1
        %s259 = scalar_select %p258, %s14, 1
        %s260 = smul.addr %s259, 16
        %s261 = smul.addr %s260, 8
        %s262 = scalar_lea.vmem %s0, %s261
      $region44: #{downsample_forward.1} parent=39 // pred_fallthru
        _
      // Predicated region
      $region45: #{downsample_forward.1} parent=39 // pred_check
        %p263 = pneg %p60
      $region46: #{downsample_forward.1} parent=39 // pred_check_branch
        %265 = sbr.rel (%p263) target = $region48
      $region47: #{downsample_forward.1} parent=39 // pred_region
        %p266 = scmp.lt.s32.totalorder %s14, 1
        %s267 = scalar_select %p266, %s14, 1
        %s268 = scalar_lea.vmem %s1, %s267
      $region48: #{downsample_forward.1} parent=39 // pred_fallthru
        _
    $region40: #{downsample_forward.1} parent=5 // pred_fallthru
      _
    %p269 = scmp.le.s32.totalorder 1, %s14
    %p270 = scmp.lt.s32.totalorder %s14, 3
    %p271 = pnand %p269, %p270
    %p272 = pneg %p271
    // Predicated region
    $region49: #{downsample_forward.1} parent=5 // pred_check
      _
    $region50: #{downsample_forward.1} parent=5 // pred_check_branch
      %274 = sbr.rel (%p271) target = $region52
    $region51: #{downsample_forward.1} parent=5 // pred_region
      %s275 = ssub.s32 %s14, 1
      %p276 = scmp.lt.s32.totalorder %s19, 1
      %s277 = scalar_select %p276, %s19, 1
      %s278 = smul.addr %s277, 16
      %s279 = smul.addr %s278, 8
      %s280 = scalar_lea.vmem %s0, %s279
      %p281 = pneg %p40
      %p282 = pneg %p37
      %p283 = scmp.lt.s32.totalorder %s19, 1
      %s284 = scalar_select %p283, %s19, 1
      %s285 = scalar_lea.vmem %s1, %s284
      %p286 = pneg %p66
      %p287 = pneg %p63
      %p288 = pneg %p87
      %p289 = pneg %p84
      %p290 = pneg %p108
      %p291 = pneg %p105
      %p292 = pneg %p129
      %p293 = pneg %p126
      %p294 = pneg %p150
      %p295 = pneg %p147
      %p296 = pneg %p171
      %p297 = pneg %p168
      %p298 = pneg %p192
      %p299 = pneg %p189
      %p300 = pneg %p218
      %p301 = pneg %p215
      %p302 = scmp.lt.s32.totalorder %s19, 1
      %s303 = scalar_select %p302, %s19, 1
      %s304 = smul.addr %s303, 8
      %s305 = smul.addr %s304, 8
      %s306 = scalar_lea.vmem %s8, %s305
      %p307 = scmp.lt.s32.totalorder %s19, 1
      %s308 = scalar_select %p307, %s19, 1
      %s309 = smul.addr %s308, 16
      %s310 = smul.addr %s309, 8
      %s311 = scalar_lea.vmem %s0, %s310
      %p312 = scmp.lt.s32.totalorder %s19, 1
      %s313 = scalar_select %p312, %s19, 1
      %s314 = scalar_lea.vmem %s1, %s313
      %p315 = scmp.lt.s32.totalorder %s19, 1
      %s316 = scalar_select %p315, %s19, 1
      %s317 = smul.addr %s316, 8
      %s318 = smul.addr %s317, 8
      %s319 = scalar_lea.vmem %s8, %s318
      %v321 = vld [vmem:[%s311] sm:$0xff]
      %v322 = vld [vmem:[%s311 + $0x8] sm:$0xff]
      %v323 = vld [vmem:[%s311 + $0x10] sm:$0xff]
      %v324 = vld [vmem:[%s311 + $0x18] sm:$0xff]
      %v325 = vld [vmem:[%s311 + $0x20] sm:$0xff]
      %v326 = vld [vmem:[%s311 + $0x28] sm:$0xff]
      %v327 = vld [vmem:[%s311 + $0x30] sm:$0xff]
      %v328 = vld [vmem:[%s311 + $0x38] sm:$0xff]
      %v329 = vld [vmem:[%s311 + $0x40] sm:$0xff]
      %v330 = vld [vmem:[%s311 + $0x48] sm:$0xff]
      %v331 = vld [vmem:[%s311 + $0x50] sm:$0xff]
      %v332 = vld [vmem:[%s311 + $0x58] sm:$0xff]
      %v333 = vld [vmem:[%s311 + $0x60] sm:$0xff]
      %v334 = vld [vmem:[%s311 + $0x68] sm:$0xff]
      %v335 = vld [vmem:[%s311 + $0x70] sm:$0xff]
      %v336 = vld [vmem:[%s311 + $0x78] sm:$0xff]
      %353 = vrot.lane.b32.xlu0 %v321, 124
      %v354 = vpop.permute.xlu0 %353
      %355 = vrot.lane.b32.xlu0 %v322, 124
      %v356 = vpop.permute.xlu0 %355
      %357 = vrot.lane.b32.xlu0 %v323, 124
      %v358 = vpop.permute.xlu0 %357
      %359 = vrot.lane.b32.xlu0 %v324, 124
      %v360 = vpop.permute.xlu0 %359
      %361 = vrot.lane.b32.xlu0 %v325, 124
      %v362 = vpop.permute.xlu0 %361
      %363 = vrot.lane.b32.xlu0 %v326, 124
      %v364 = vpop.permute.xlu0 %363
      %365 = vrot.lane.b32.xlu0 %v327, 124
      %v366 = vpop.permute.xlu0 %365
      %367 = vrot.lane.b32.xlu0 %v328, 124
      %v368 = vpop.permute.xlu0 %367
      %369 = vrot.lane.b32.xlu0 %v329, 124
      %v370 = vpop.permute.xlu0 %369
      %371 = vrot.lane.b32.xlu0 %v330, 124
      %v372 = vpop.permute.xlu0 %371
      %373 = vrot.lane.b32.xlu0 %v331, 124
      %v374 = vpop.permute.xlu0 %373
      %375 = vrot.lane.b32.xlu0 %v332, 124
      %v376 = vpop.permute.xlu0 %375
      %377 = vrot.lane.b32.xlu0 %v333, 124
      %v378 = vpop.permute.xlu0 %377
      %379 = vrot.lane.b32.xlu0 %v334, 124
      %v380 = vpop.permute.xlu0 %379
      %381 = vrot.lane.b32.xlu0 %v335, 124
      %v382 = vpop.permute.xlu0 %381
      %383 = vrot.lane.b32.xlu0 %v336, 124
      %v384 = vpop.permute.xlu0 %383
      %v401 = vmax.f32 %v321, %v354
      %v402 = vmax.f32 %v322, %v356
      %v403 = vmax.f32 %v323, %v358
      %v404 = vmax.f32 %v324, %v360
      %v405 = vmax.f32 %v325, %v362
      %v406 = vmax.f32 %v326, %v364
      %v407 = vmax.f32 %v327, %v366
      %v408 = vmax.f32 %v328, %v368
      %v409 = vmax.f32 %v329, %v370
      %v410 = vmax.f32 %v330, %v372
      %v411 = vmax.f32 %v331, %v374
      %v412 = vmax.f32 %v332, %v376
      %v413 = vmax.f32 %v333, %v378
      %v414 = vmax.f32 %v334, %v380
      %v415 = vmax.f32 %v335, %v382
      %v416 = vmax.f32 %v336, %v384
      %v417 = vmax.f32 %v401, %v402
      %v418 = vmax.f32 %v403, %v404
      %v419 = vmax.f32 %v405, %v406
      %v420 = vmax.f32 %v407, %v408
      %v421 = vmax.f32 %v409, %v410
      %v422 = vmax.f32 %v411, %v412
      %v423 = vmax.f32 %v413, %v414
      %v424 = vmax.f32 %v415, %v416
      %vm425 = vcmask 31744
      %426 = vst.msk [vmem:[#allocation2] sm:$0xff] %vm425, 0.0
      %vm427 = vcmask 25600
      %428 = vst.msk [vmem:[#allocation2 + $0x8] sm:$0x3] %vm427, 0.0
      %s429 = scalar_lea.vmem [#allocation2], 144
      %430 = vst.msk [vmem:[%s429] sm:$0xff] %vm425, 0.0
      %431 = vst.msk [vmem:[%s429 + $0x8] sm:$0x3] %vm427, 0.0
      %vm432 = vcmask 24576
      %433 = vst.msk [vmem:[#allocation2] sm:$0x1] %vm432, 0.0
      %434 = vst.msk [vmem:[#allocation2 + $0x10] sm:$0x1] %vm432, 0.0
      %435 = vst.msk [vmem:[#allocation2 + $0x20] sm:$0x1] %vm432, 0.0
      %436 = vst.msk [vmem:[#allocation2 + $0x30] sm:$0x1] %vm432, 0.0
      %437 = vst.msk [vmem:[#allocation2 + $0x40] sm:$0x1] %vm432, 0.0
      %438 = vst.msk [vmem:[#allocation2 + $0x50] sm:$0x1] %vm432, 0.0
      %439 = vst.msk [vmem:[#allocation2 + $0x60] sm:$0x1] %vm432, 0.0
      %440 = vst.msk [vmem:[#allocation2 + $0x70] sm:$0x1] %vm432, 0.0
      %441 = vst.msk [vmem:[#allocation2 + $0x80] sm:$0x1] %vm432, 0.0
      %442 = vst.msk [vmem:[#allocation2 + $0x90] sm:$0x1] %vm432, 0.0
      %443 = vst.msk [vmem:[#allocation2 + $0x9] sm:$0x1] %vm432, 0.0
      %444 = vst.msk [vmem:[#allocation2 + $0x19] sm:$0x1] %vm432, 0.0
      %445 = vst.msk [vmem:[#allocation2 + $0x29] sm:$0x1] %vm432, 0.0
      %446 = vst.msk [vmem:[#allocation2 + $0x39] sm:$0x1] %vm432, 0.0
      %447 = vst.msk [vmem:[#allocation2 + $0x49] sm:$0x1] %vm432, 0.0
      %448 = vst.msk [vmem:[#allocation2 + $0x59] sm:$0x1] %vm432, 0.0
      %449 = vst.msk [vmem:[#allocation2 + $0x69] sm:$0x1] %vm432, 0.0
      %450 = vst.msk [vmem:[#allocation2 + $0x79] sm:$0x1] %vm432, 0.0
      %451 = vst.msk [vmem:[#allocation2 + $0x89] sm:$0x1] %vm432, 0.0
      %452 = vst.msk [vmem:[#allocation2 + $0x99] sm:$0x1] %vm432, 0.0
      %s453 = scalar_lea.vmem [#allocation2], 16
      %454 = vst.msk [vmem:[%s453 + $0x1] sm:$0xff] %vm425, %v417
      %455 = vst.msk [vmem:[%s453 + $0x11] sm:$0xff] %vm425, %v418
      %456 = vst.msk [vmem:[%s453 + $0x21] sm:$0xff] %vm425, %v419
      %457 = vst.msk [vmem:[%s453 + $0x31] sm:$0xff] %vm425, %v420
      %458 = vst.msk [vmem:[%s453 + $0x41] sm:$0xff] %vm425, %v421
      %459 = vst.msk [vmem:[%s453 + $0x51] sm:$0xff] %vm425, %v422
      %460 = vst.msk [vmem:[%s453 + $0x61] sm:$0xff] %vm425, %v423
      %461 = vst.msk [vmem:[%s453 + $0x71] sm:$0xff] %vm425, %v424
      %v462 = vld [vmem:[#allocation2] sm:$0xff]
      %v463 = vld [vmem:[#allocation2 + $0x10] sm:$0xff]
      %v464 = vld [vmem:[#allocation2 + $0x20] sm:$0xff]
      %v465 = vld [vmem:[#allocation2 + $0x30] sm:$0xff]
      %v466 = vld [vmem:[#allocation2 + $0x40] sm:$0xff]
      %v467 = vld [vmem:[#allocation2 + $0x50] sm:$0xff]
      %v468 = vld [vmem:[#allocation2 + $0x60] sm:$0xff]
      %v469 = vld [vmem:[#allocation2 + $0x70] sm:$0xff]
      %v470 = vpack.c.bf16 %v463, %v462
      %v471 = vpack.c.bf16 %v465, %v464
      %v472 = vpack.c.bf16 %v467, %v466
      %v473 = vpack.c.bf16 %v469, %v468
      %v474 = vld [vmem:[%s2] sm:$0x3]
      %v475 = vld [vmem:[#allocation2 + $0x1] sm:$0xff]
      %v476 = vld [vmem:[#allocation2 + $0x11] sm:$0xff]
      %v477 = vld [vmem:[#allocation2 + $0x21] sm:$0xff]
      %v478 = vld [vmem:[#allocation2 + $0x31] sm:$0xff]
      %v479 = vld [vmem:[#allocation2 + $0x41] sm:$0xff]
      %v480 = vld [vmem:[#allocation2 + $0x51] sm:$0xff]
      %v481 = vld [vmem:[#allocation2 + $0x61] sm:$0xff]
      %v482 = vld [vmem:[#allocation2 + $0x71] sm:$0xff]
      %v483 = vpack.c.bf16 %v476, %v475
      %v484 = vpack.c.bf16 %v478, %v477
      %v485 = vpack.c.bf16 %v480, %v479
      %v486 = vpack.c.bf16 %v482, %v481
      %v487 = vld [vmem:[%s2] sm:$0xc]
      %v489 = vunpack.c.l.b16 %v487
      %v490 = vpack.c.b16 %v489, %v489
      %v491 = vrot.slane %v490, 2
      %v493 = vsel %vm425, %v483, 0
      %v496 = vsel %vm425, %v484, 0
      %v499 = vsel %vm425, %v485, 0
      %v502 = vsel %vm425, %v486, 0
      %vm504 = vcmask 1041408
      %v506 = vsel %vm504, %v491, 0
      %508 = vmatprep.subr.bf16.mxu0 0
      %509 = vmatpush1.bf16.msra.mxu0 %v506
      %510 = vmatprep.subr.bf16.mxu0 0
      %511 = vmatpush1.bf16.msra.mxu0 0
      %512 = vmatprep.subr.bf16.mxu0 0
      %513 = vmatpush1.bf16.msra.mxu0 0
      %514 = vmatprep.subr.bf16.mxu0 0
      %515 = vmatpush1.bf16.msra.mxu0 0
      %516 = vmatprep.subr.bf16.mxu0 0
      %517 = vmatpush1.bf16.msra.mxu0 0
      %518 = vmatprep.subr.bf16.mxu0 0
      %519 = vmatpush1.bf16.msra.mxu0 0
      %520 = vmatprep.subr.bf16.mxu0 0
      %521 = vmatpush1.bf16.msra.mxu0 0
      %522 = vmatprep.subr.bf16.mxu0 0
      %523 = vmatpush1.bf16.msra.mxu0 0
      %524 = vmatprep.subr.bf16.mxu0 0
      %525 = vmatpush1.bf16.msra.mxu0 0
      %526 = vmatprep.subr.bf16.mxu0 0
      %527 = vmatpush1.bf16.msra.mxu0 0
      %528 = vmatprep.subr.bf16.mxu0 0
      %529 = vmatpush1.bf16.msra.mxu0 0
      %530 = vmatprep.subr.bf16.mxu0 0
      %531 = vmatpush1.bf16.msra.mxu0 0
      %532 = vmatprep.subr.bf16.mxu0 0
      %533 = vmatpush1.bf16.msra.mxu0 0
      %534 = vmatprep.subr.bf16.mxu0 0
      %535 = vmatpush1.bf16.msra.mxu0 0
      %536 = vmatprep.subr.bf16.mxu0 0
      %537 = vmatpush1.bf16.msra.mxu0 0
      %538 = vmatprep.subr.bf16.mxu0 0
      %539 = vmatpush1.bf16.msra.mxu0 0
      %540 = vmatprep.mubr.bf16.mxu0 0
      %541 = vmatmul.mubr.bf16.gmra.mrb[0].mxu0 %v493
      %v542 = vpop.f32.mrb[0].mxu0
      %v543 = vadd.f32 0.0, %v542
      %v544 = vpop.f32.mrb[0].mxu0
      %v545 = vpop.f32.mrb[0].mxu0
      %v546 = vadd.f32 0.0, %v545
      %v547 = vpop.f32.mrb[0].mxu0
      %548 = vmatprep.mubr.bf16.mxu0 0
      %549 = vmatmul.mubr.bf16.gmra.mrb[0].mxu0 %v496
      %v550 = vpop.f32.mrb[0].mxu0
      %v551 = vadd.f32 0.0, %v550
      %v552 = vpop.f32.mrb[0].mxu0
      %v553 = vpop.f32.mrb[0].mxu0
      %v554 = vadd.f32 0.0, %v553
      %v555 = vpop.f32.mrb[0].mxu0
      %556 = vmatprep.mubr.bf16.mxu0 0
      %557 = vmatmul.mubr.bf16.gmra.mrb[0].mxu0 %v499
      %v558 = vpop.f32.mrb[0].mxu0
      %v559 = vadd.f32 0.0, %v558
      %v560 = vpop.f32.mrb[0].mxu0
      %v561 = vpop.f32.mrb[0].mxu0
      %v562 = vadd.f32 0.0, %v561
      %v563 = vpop.f32.mrb[0].mxu0
      %564 = vmatprep.mubr.bf16.mxu0 0
      %565 = vmatmul.mubr.bf16.gmra.mrb[0].mxu0 %v502
      %v566 = vpop.f32.mrb[0].mxu0
      %v567 = vadd.f32 0.0, %v566
      %v568 = vpop.f32.mrb[0].mxu0
      %v569 = vpop.f32.mrb[0].mxu0
      %v570 = vadd.f32 0.0, %v569
      %v571 = vpop.f32.mrb[0].mxu0
      %572 = vdwg.mxu0
      %v574 = vsel %vm425, %v470, 0
      %v577 = vsel %vm425, %v471, 0
      %v580 = vsel %vm425, %v472, 0
      %v583 = vsel %vm425, %v473, 0
      %v586 = vsel %vm504, %v474, 0
      %588 = vmatprep.subr.bf16.mxu0 0
      %589 = vmatpush1.bf16.msra.mxu0 %v586
      %590 = vmatprep.subr.bf16.mxu0 0
      %591 = vmatpush1.bf16.msra.mxu0 0
      %592 = vmatprep.subr.bf16.mxu0 0
      %593 = vmatpush1.bf16.msra.mxu0 0
      %594 = vmatprep.subr.bf16.mxu0 0
      %595 = vmatpush1.bf16.msra.mxu0 0
      %596 = vmatprep.subr.bf16.mxu0 0
      %597 = vmatpush1.bf16.msra.mxu0 0
      %598 = vmatprep.subr.bf16.mxu0 0
      %599 = vmatpush1.bf16.msra.mxu0 0
      %600 = vmatprep.subr.bf16.mxu0 0
      %601 = vmatpush1.bf16.msra.mxu0 0
      %602 = vmatprep.subr.bf16.mxu0 0
      %603 = vmatpush1.bf16.msra.mxu0 0
      %604 = vmatprep.subr.bf16.mxu0 0
      %605 = vmatpush1.bf16.msra.mxu0 0
      %606 = vmatprep.subr.bf16.mxu0 0
      %607 = vmatpush1.bf16.msra.mxu0 0
      %608 = vmatprep.subr.bf16.mxu0 0
      %609 = vmatpush1.bf16.msra.mxu0 0
      %610 = vmatprep.subr.bf16.mxu0 0
      %611 = vmatpush1.bf16.msra.mxu0 0
      %612 = vmatprep.subr.bf16.mxu0 0
      %613 = vmatpush1.bf16.msra.mxu0 0
      %614 = vmatprep.subr.bf16.mxu0 0
      %615 = vmatpush1.bf16.msra.mxu0 0
      %616 = vmatprep.subr.bf16.mxu0 0
      %617 = vmatpush1.bf16.msra.mxu0 0
      %618 = vmatprep.subr.bf16.mxu0 0
      %619 = vmatpush1.bf16.msra.mxu0 0
      %620 = vmatprep.mubr.bf16.mxu0 0
      %621 = vmatmul.mubr.bf16.gmra.mrb[0].mxu0 %v574
      %v622 = vpop.f32.mrb[0].mxu0
      %v623 = vadd.f32 %v543, %v622
      %v624 = vpop.f32.mrb[0].mxu0
      %v625 = vpop.f32.mrb[0].mxu0
      %v626 = vadd.f32 %v546, %v625
      %v627 = vpop.f32.mrb[0].mxu0
      %628 = vmatprep.mubr.bf16.mxu0 0
      %629 = vmatmul.mubr.bf16.gmra.mrb[0].mxu0 %v577
      %v630 = vpop.f32.mrb[0].mxu0
      %v631 = vadd.f32 %v551, %v630
      %v632 = vpop.f32.mrb[0].mxu0
      %v633 = vpop.f32.mrb[0].mxu0
      %v634 = vadd.f32 %v554, %v633
      %v635 = vpop.f32.mrb[0].mxu0
      %636 = vmatprep.mubr.bf16.mxu0 0
      %637 = vmatmul.mubr.bf16.gmra.mrb[0].mxu0 %v580
      %v638 = vpop.f32.mrb[0].mxu0
      %v639 = vadd.f32 %v559, %v638
      %v640 = vpop.f32.mrb[0].mxu0
      %v641 = vpop.f32.mrb[0].mxu0
      %v642 = vadd.f32 %v562, %v641
      %v643 = vpop.f32.mrb[0].mxu0
      %644 = vmatprep.mubr.bf16.mxu0 0
      %645 = vmatmul.mubr.bf16.gmra.mrb[0].mxu0 %v583
      %v646 = vpop.f32.mrb[0].mxu0
      %v647 = vadd.f32 %v567, %v646
      %v648 = vpop.f32.mrb[0].mxu0
      %v649 = vpop.f32.mrb[0].mxu0
      %v650 = vadd.f32 %v570, %v649
      %v651 = vpop.f32.mrb[0].mxu0
      %652 = vdwg.mxu0
      %v653 = vld [vmem:[#allocation2 + $0x2] sm:$0xff]
      %v654 = vld [vmem:[#allocation2 + $0x12] sm:$0xff]
      %v655 = vld [vmem:[#allocation2 + $0x22] sm:$0xff]
      %v656 = vld [vmem:[#allocation2 + $0x32] sm:$0xff]
      %v657 = vld [vmem:[#allocation2 + $0x42] sm:$0xff]
      %v658 = vld [vmem:[#allocation2 + $0x52] sm:$0xff]
      %v659 = vld [vmem:[#allocation2 + $0x62] sm:$0xff]
      %v660 = vld [vmem:[#allocation2 + $0x72] sm:$0xff]
      %v661 = vpack.c.bf16 %v654, %v653
      %v662 = vpack.c.bf16 %v656, %v655
      %v663 = vpack.c.bf16 %v658, %v657
      %v664 = vpack.c.bf16 %v660, %v659
      %v665 = vld [vmem:[%s2 + $0x4] sm:$0x3]
      %v667 = vsel %vm425, %v661, 0
      %v670 = vsel %vm425, %v662, 0
      %v673 = vsel %vm425, %v663, 0
      %v676 = vsel %vm425, %v664, 0
      %v679 = vsel %vm504, %v665, 0
      %681 = vmatprep.subr.bf16.mxu0 0
      %682 = vmatpush1.bf16.msra.mxu0 %v679
      %683 = vmatprep.subr.bf16.mxu0 0
      %684 = vmatpush1.bf16.msra.mxu0 0
      %685 = vmatprep.subr.bf16.mxu0 0
      %686 = vmatpush1.bf16.msra.mxu0 0
      %687 = vmatprep.subr.bf16.mxu0 0
      %688 = vmatpush1.bf16.msra.mxu0 0
      %689 = vmatprep.subr.bf16.mxu0 0
      %690 = vmatpush1.bf16.msra.mxu0 0
      %691 = vmatprep.subr.bf16.mxu0 0
      %692 = vmatpush1.bf16.msra.mxu0 0
      %693 = vmatprep.subr.bf16.mxu0 0
      %694 = vmatpush1.bf16.msra.mxu0 0
      %695 = vmatprep.subr.bf16.mxu0 0
      %696 = vmatpush1.bf16.msra.mxu0 0
      %697 = vmatprep.subr.bf16.mxu0 0
      %698 = vmatpush1.bf16.msra.mxu0 0
      %699 = vmatprep.subr.bf16.mxu0 0
      %700 = vmatpush1.bf16.msra.mxu0 0
      %701 = vmatprep.subr.bf16.mxu0 0
      %702 = vmatpush1.bf16.msra.mxu0 0
      %703 = vmatprep.subr.bf16.mxu0 0
      %704 = vmatpush1.bf16.msra.mxu0 0
      %705 = vmatprep.subr.bf16.mxu0 0
      %706 = vmatpush1.bf16.msra.mxu0 0
      %707 = vmatprep.subr.bf16.mxu0 0
      %708 = vmatpush1.bf16.msra.mxu0 0
      %709 = vmatprep.subr.bf16.mxu0 0
      %710 = vmatpush1.bf16.msra.mxu0 0
      %711 = vmatprep.subr.bf16.mxu0 0
      %712 = vmatpush1.bf16.msra.mxu0 0
      %713 = vmatprep.mubr.bf16.mxu0 0
      %714 = vmatmul.mubr.bf16.gmra.mrb[0].mxu0 %v667
      %v715 = vpop.f32.mrb[0].mxu0
      %v716 = vadd.f32 0.0, %v715
      %v717 = vpop.f32.mrb[0].mxu0
      %v718 = vpop.f32.mrb[0].mxu0
      %v719 = vadd.f32 0.0, %v718
      %v720 = vpop.f32.mrb[0].mxu0
      %721 = vmatprep.mubr.bf16.mxu0 0
      %722 = vmatmul.mubr.bf16.gmra.mrb[0].mxu0 %v670
      %v723 = vpop.f32.mrb[0].mxu0
      %v724 = vadd.f32 0.0, %v723
      %v725 = vpop.f32.mrb[0].mxu0
      %v726 = vpop.f32.mrb[0].mxu0
      %v727 = vadd.f32 0.0, %v726
      %v728 = vpop.f32.mrb[0].mxu0
      %729 = vmatprep.mubr.bf16.mxu0 0
      %730 = vmatmul.mubr.bf16.gmra.mrb[0].mxu0 %v673
      %v731 = vpop.f32.mrb[0].mxu0
      %v732 = vadd.f32 0.0, %v731
      %v733 = vpop.f32.mrb[0].mxu0
      %v734 = vpop.f32.mrb[0].mxu0
      %v735 = vadd.f32 0.0, %v734
      %v736 = vpop.f32.mrb[0].mxu0
      %737 = vmatprep.mubr.bf16.mxu0 0
      %738 = vmatmul.mubr.bf16.gmra.mrb[0].mxu0 %v676
      %v739 = vpop.f32.mrb[0].mxu0
      %v740 = vadd.f32 0.0, %v739
      %v741 = vpop.f32.mrb[0].mxu0
      %v742 = vpop.f32.mrb[0].mxu0
      %v743 = vadd.f32 0.0, %v742
      %v744 = vpop.f32.mrb[0].mxu0
      %745 = vdwg.mxu0
      %v746 = vadd.f32 %v623, %v716
      %v747 = vadd.f32 %v626, %v719
      %v748 = vadd.f32 %v631, %v724
      %v749 = vadd.f32 %v634, %v727
      %v750 = vadd.f32 %v639, %v732
      %v751 = vadd.f32 %v642, %v735
      %v752 = vadd.f32 %v647, %v740
      %v753 = vadd.f32 %v650, %v743
      %v754 = vld [vmem:[%s453] sm:$0xff]
      %v755 = vld [vmem:[%s453 + $0x10] sm:$0xff]
      %v756 = vld [vmem:[%s453 + $0x20] sm:$0xff]
      %v757 = vld [vmem:[%s453 + $0x30] sm:$0xff]
      %v758 = vld [vmem:[%s453 + $0x40] sm:$0xff]
      %v759 = vld [vmem:[%s453 + $0x50] sm:$0xff]
      %v760 = vld [vmem:[%s453 + $0x60] sm:$0xff]
      %v761 = vld [vmem:[%s453 + $0x70] sm:$0xff]
      %v762 = vpack.c.bf16 %v755, %v754
      %v763 = vpack.c.bf16 %v757, %v756
      %v764 = vpack.c.bf16 %v759, %v758
      %v765 = vpack.c.bf16 %v761, %v760
      %v766 = vld [vmem:[%s2 + $0x4] sm:$0xc]
      %v768 = vunpack.c.l.b16 %v766
      %v769 = vpack.c.b16 %v768, %v768
      %v770 = vrot.slane %v769, 2
      %v772 = vsel %vm425, %v762, 0
      %v775 = vsel %vm425, %v763, 0
      %v778 = vsel %vm425, %v764, 0
      %v781 = vsel %vm425, %v765, 0
      %v784 = vsel %vm504, %v770, 0
      %786 = vmatprep.subr.bf16.mxu0 0
      %787 = vmatpush1.bf16.msra.mxu0 %v784
      %788 = vmatprep.subr.bf16.mxu0 0
      %789 = vmatpush1.bf16.msra.mxu0 0
      %790 = vmatprep.subr.bf16.mxu0 0
      %791 = vmatpush1.bf16.msra.mxu0 0
      %792 = vmatprep.subr.bf16.mxu0 0
      %793 = vmatpush1.bf16.msra.mxu0 0
      %794 = vmatprep.subr.bf16.mxu0 0
      %795 = vmatpush1.bf16.msra.mxu0 0
      %796 = vmatprep.subr.bf16.mxu0 0
      %797 = vmatpush1.bf16.msra.mxu0 0
      %798 = vmatprep.subr.bf16.mxu0 0
      %799 = vmatpush1.bf16.msra.mxu0 0
      %800 = vmatprep.subr.bf16.mxu0 0
      %801 = vmatpush1.bf16.msra.mxu0 0
      %802 = vmatprep.subr.bf16.mxu0 0
      %803 = vmatpush1.bf16.msra.mxu0 0
      %804 = vmatprep.subr.bf16.mxu0 0
      %805 = vmatpush1.bf16.msra.mxu0 0
      %806 = vmatprep.subr.bf16.mxu0 0
      %807 = vmatpush1.bf16.msra.mxu0 0
      %808 = vmatprep.subr.bf16.mxu0 0
      %809 = vmatpush1.bf16.msra.mxu0 0
      %810 = vmatprep.subr.bf16.mxu0 0
      %811 = vmatpush1.bf16.msra.mxu0 0
      %812 = vmatprep.subr.bf16.mxu0 0
      %813 = vmatpush1.bf16.msra.mxu0 0
      %814 = vmatprep.subr.bf16.mxu0 0
      %815 = vmatpush1.bf16.msra.mxu0 0
      %816 = vmatprep.subr.bf16.mxu0 0
      %817 = vmatpush1.bf16.msra.mxu0 0
      %818 = vmatprep.mubr.bf16.mxu0 0
      %819 = vmatmul.mubr.bf16.gmra.mrb[0].mxu0 %v772
      %v820 = vpop.f32.mrb[0].mxu0
      %v821 = vadd.f32 0.0, %v820
      %v822 = vpop.f32.mrb[0].mxu0
      %v823 = vpop.f32.mrb[0].mxu0
      %v824 = vadd.f32 0.0, %v823
      %v825 = vpop.f32.mrb[0].mxu0
      %826 = vmatprep.mubr.bf16.mxu0 0
      %827 = vmatmul.mubr.bf16.gmra.mrb[0].mxu0 %v775
      %v828 = vpop.f32.mrb[0].mxu0
      %v829 = vadd.f32 0.0, %v828
      %v830 = vpop.f32.mrb[0].mxu0
      %v831 = vpop.f32.mrb[0].mxu0
      %v832 = vadd.f32 0.0, %v831
      %v833 = vpop.f32.mrb[0].mxu0
      %834 = vmatprep.mubr.bf16.mxu0 0
      %835 = vmatmul.mubr.bf16.gmra.mrb[0].mxu0 %v778
      %v836 = vpop.f32.mrb[0].mxu0
      %v837 = vadd.f32 0.0, %v836
      %v838 = vpop.f32.mrb[0].mxu0
      %v839 = vpop.f32.mrb[0].mxu0
      %v840 = vadd.f32 0.0, %v839
      %v841 = vpop.f32.mrb[0].mxu0
      %842 = vmatprep.mubr.bf16.mxu0 0
      %843 = vmatmul.mubr.bf16.gmra.mrb[0].mxu0 %v781
      %v844 = vpop.f32.mrb[0].mxu0
      %v845 = vadd.f32 0.0, %v844
      %v846 = vpop.f32.mrb[0].mxu0
      %v847 = vpop.f32.mrb[0].mxu0
      %v848 = vadd.f32 0.0, %v847
      %v849 = vpop.f32.mrb[0].mxu0
      %850 = vdwg.mxu0
      %v851 = vadd.f32 %v746, %v821
      %v852 = vadd.f32 %v747, %v824
      %v853 = vadd.f32 %v748, %v829
      %v854 = vadd.f32 %v749, %v832
      %v855 = vadd.f32 %v750, %v837
      %v856 = vadd.f32 %v751, %v840
      %v857 = vadd.f32 %v752, %v845
      %v858 = vadd.f32 %v753, %v848
      %v859 = vld [vmem:[%s453 + $0x1] sm:$0xff]
      %v860 = vld [vmem:[%s453 + $0x11] sm:$0xff]
      %v861 = vld [vmem:[%s453 + $0x21] sm:$0xff]
      %v862 = vld [vmem:[%s453 + $0x31] sm:$0xff]
      %v863 = vld [vmem:[%s453 + $0x41] sm:$0xff]
      %v864 = vld [vmem:[%s453 + $0x51] sm:$0xff]
      %v865 = vld [vmem:[%s453 + $0x61] sm:$0xff]
      %v866 = vld [vmem:[%s453 + $0x71] sm:$0xff]
      %v867 = vpack.c.bf16 %v860, %v859
      %v868 = vpack.c.bf16 %v862, %v861
      %v869 = vpack.c.bf16 %v864, %v863
      %v870 = vpack.c.bf16 %v866, %v865
      %v871 = vld [vmem:[%s2 + $0x8] sm:$0x3]
      %v873 = vsel %vm425, %v867, 0
      %v876 = vsel %vm425, %v868, 0
      %v879 = vsel %vm425, %v869, 0
      %v882 = vsel %vm425, %v870, 0
      %v885 = vsel %vm504, %v871, 0
      %887 = vmatprep.subr.bf16.mxu0 0
      %888 = vmatpush1.bf16.msra.mxu0 %v885
      %889 = vmatprep.subr.bf16.mxu0 0
      %890 = vmatpush1.bf16.msra.mxu0 0
      %891 = vmatprep.subr.bf16.mxu0 0
      %892 = vmatpush1.bf16.msra.mxu0 0
      %893 = vmatprep.subr.bf16.mxu0 0
      %894 = vmatpush1.bf16.msra.mxu0 0
      %895 = vmatprep.subr.bf16.mxu0 0
      %896 = vmatpush1.bf16.msra.mxu0 0
      %897 = vmatprep.subr.bf16.mxu0 0
      %898 = vmatpush1.bf16.msra.mxu0 0
      %899 = vmatprep.subr.bf16.mxu0 0
      %900 = vmatpush1.bf16.msra.mxu0 0
      %901 = vmatprep.subr.bf16.mxu0 0
      %902 = vmatpush1.bf16.msra.mxu0 0
      %903 = vmatprep.subr.bf16.mxu0 0
      %904 = vmatpush1.bf16.msra.mxu0 0
      %905 = vmatprep.subr.bf16.mxu0 0
      %906 = vmatpush1.bf16.msra.mxu0 0
      %907 = vmatprep.subr.bf16.mxu0 0
      %908 = vmatpush1.bf16.msra.mxu0 0
      %909 = vmatprep.subr.bf16.mxu0 0
      %910 = vmatpush1.bf16.msra.mxu0 0
      %911 = vmatprep.subr.bf16.mxu0 0
      %912 = vmatpush1.bf16.msra.mxu0 0
      %913 = vmatprep.subr.bf16.mxu0 0
      %914 = vmatpush1.bf16.msra.mxu0 0
      %915 = vmatprep.subr.bf16.mxu0 0
      %916 = vmatpush1.bf16.msra.mxu0 0
      %917 = vmatprep.subr.bf16.mxu0 0
      %918 = vmatpush1.bf16.msra.mxu0 0
      %919 = vmatprep.mubr.bf16.mxu0 0
      %920 = vmatmul.mubr.bf16.gmra.mrb[0].mxu0 %v873
      %v921 = vpop.f32.mrb[0].mxu0
      %v922 = vadd.f32 0.0, %v921
      %v923 = vpop.f32.mrb[0].mxu0
      %v924 = vpop.f32.mrb[0].mxu0
      %v925 = vadd.f32 0.0, %v924
      %v926 = vpop.f32.mrb[0].mxu0
      %927 = vmatprep.mubr.bf16.mxu0 0
      %928 = vmatmul.mubr.bf16.gmra.mrb[0].mxu0 %v876
      %v929 = vpop.f32.mrb[0].mxu0
      %v930 = vadd.f32 0.0, %v929
      %v931 = vpop.f32.mrb[0].mxu0
      %v932 = vpop.f32.mrb[0].mxu0
      %v933 = vadd.f32 0.0, %v932
      %v934 = vpop.f32.mrb[0].mxu0
      %935 = vmatprep.mubr.bf16.mxu0 0
      %936 = vmatmul.mubr.bf16.gmra.mrb[0].mxu0 %v879
      %v937 = vpop.f32.mrb[0].mxu0
      %v938 = vadd.f32 0.0, %v937
      %v939 = vpop.f32.mrb[0].mxu0
      %v940 = vpop.f32.mrb[0].mxu0
      %v941 = vadd.f32 0.0, %v940
      %v942 = vpop.f32.mrb[0].mxu0
      %943 = vmatprep.mubr.bf16.mxu0 0
      %944 = vmatmul.mubr.bf16.gmra.mrb[0].mxu0 %v882
      %v945 = vpop.f32.mrb[0].mxu0
      %v946 = vadd.f32 0.0, %v945
      %v947 = vpop.f32.mrb[0].mxu0
      %v948 = vpop.f32.mrb[0].mxu0
      %v949 = vadd.f32 0.0, %v948
      %v950 = vpop.f32.mrb[0].mxu0
      %951 = vdwg.mxu0
      %v952 = vadd.f32 %v851, %v922
      %v953 = vadd.f32 %v852, %v925
      %v954 = vadd.f32 %v853, %v930
      %v955 = vadd.f32 %v854, %v933
      %v956 = vadd.f32 %v855, %v938
      %v957 = vadd.f32 %v856, %v941
      %v958 = vadd.f32 %v857, %v946
      %v959 = vadd.f32 %v858, %v949
      %v960 = vld [vmem:[%s453 + $0x2] sm:$0xff]
      %v961 = vld [vmem:[%s453 + $0x12] sm:$0xff]
      %v962 = vld [vmem:[%s453 + $0x22] sm:$0xff]
      %v963 = vld [vmem:[%s453 + $0x32] sm:$0xff]
      %v964 = vld [vmem:[%s453 + $0x42] sm:$0xff]
      %v965 = vld [vmem:[%s453 + $0x52] sm:$0xff]
      %v966 = vld [vmem:[%s453 + $0x62] sm:$0xff]
      %v967 = vld [vmem:[%s453 + $0x72] sm:$0xff]
      %v968 = vpack.c.bf16 %v961, %v960
      %v969 = vpack.c.bf16 %v963, %v962
      %v970 = vpack.c.bf16 %v965, %v964
      %v971 = vpack.c.bf16 %v967, %v966
      %v972 = vld [vmem:[%s2 + $0x8] sm:$0xc]
      %v974 = vunpack.c.l.b16 %v972
      %v975 = vpack.c.b16 %v974, %v974
      %v976 = vrot.slane %v975, 2
      %v978 = vsel %vm425, %v968, 0
      %v981 = vsel %vm425, %v969, 0
      %v984 = vsel %vm425, %v970, 0
      %v987 = vsel %vm425, %v971, 0
      %v990 = vsel %vm504, %v976, 0
      %992 = vmatprep.subr.bf16.mxu0 0
      %993 = vmatpush1.bf16.msra.mxu0 %v990
      %994 = vmatprep.subr.bf16.mxu0 0
      %995 = vmatpush1.bf16.msra.mxu0 0
      %996 = vmatprep.subr.bf16.mxu0 0
      %997 = vmatpush1.bf16.msra.mxu0 0
      %998 = vmatprep.subr.bf16.mxu0 0
      %999 = vmatpush1.bf16.msra.mxu0 0
      %1000 = vmatprep.subr.bf16.mxu0 0
      %1001 = vmatpush1.bf16.msra.mxu0 0
      %1002 = vmatprep.subr.bf16.mxu0 0
      %1003 = vmatpush1.bf16.msra.mxu0 0
      %1004 = vmatprep.subr.bf16.mxu0 0
      %1005 = vmatpush1.bf16.msra.mxu0 0
      %1006 = vmatprep.subr.bf16.mxu0 0
      %1007 = vmatpush1.bf16.msra.mxu0 0
      %1008 = vmatprep.subr.bf16.mxu0 0
      %1009 = vmatpush1.bf16.msra.mxu0 0
      %1010 = vmatprep.subr.bf16.mxu0 0
      %1011 = vmatpush1.bf16.msra.mxu0 0
      %1012 = vmatprep.subr.bf16.mxu0 0
      %1013 = vmatpush1.bf16.msra.mxu0 0
      %1014 = vmatprep.subr.bf16.mxu0 0
      %1015 = vmatpush1.bf16.msra.mxu0 0
      %1016 = vmatprep.subr.bf16.mxu0 0
      %1017 = vmatpush1.bf16.msra.mxu0 0
      %1018 = vmatprep.subr.bf16.mxu0 0
      %1019 = vmatpush1.bf16.msra.mxu0 0
      %1020 = vmatprep.subr.bf16.mxu0 0
      %1021 = vmatpush1.bf16.msra.mxu0 0
      %1022 = vmatprep.subr.bf16.mxu0 0
      %1023 = vmatpush1.bf16.msra.mxu0 0
      %1024 = vmatprep.mubr.bf16.mxu0 0
      %1025 = vmatmul.mubr.bf16.gmra.mrb[0].mxu0 %v978
      %v1026 = vpop.f32.mrb[0].mxu0
      %v1027 = vadd.f32 0.0, %v1026
      %v1028 = vpop.f32.mrb[0].mxu0
      %v1029 = vpop.f32.mrb[0].mxu0
      %v1030 = vadd.f32 0.0, %v1029
      %v1031 = vpop.f32.mrb[0].mxu0
      %1032 = vmatprep.mubr.bf16.mxu0 0
      %1033 = vmatmul.mubr.bf16.gmra.mrb[0].mxu0 %v981
      %v1034 = vpop.f32.mrb[0].mxu0
      %v1035 = vadd.f32 0.0, %v1034
      %v1036 = vpop.f32.mrb[0].mxu0
      %v1037 = vpop.f32.mrb[0].mxu0
      %v1038 = vadd.f32 0.0, %v1037
      %v1039 = vpop.f32.mrb[0].mxu0
      %1040 = vmatprep.mubr.bf16.mxu0 0
      %1041 = vmatmul.mubr.bf16.gmra.mrb[0].mxu0 %v984
      %v1042 = vpop.f32.mrb[0].mxu0
      %v1043 = vadd.f32 0.0, %v1042
      %v1044 = vpop.f32.mrb[0].mxu0
      %v1045 = vpop.f32.mrb[0].mxu0
      %v1046 = vadd.f32 0.0, %v1045
      %v1047 = vpop.f32.mrb[0].mxu0
      %1048 = vmatprep.mubr.bf16.mxu0 0
      %1049 = vmatmul.mubr.bf16.gmra.mrb[0].mxu0 %v987
      %v1050 = vpop.f32.mrb[0].mxu0
      %v1051 = vadd.f32 0.0, %v1050
      %v1052 = vpop.f32.mrb[0].mxu0
      %v1053 = vpop.f32.mrb[0].mxu0
      %v1054 = vadd.f32 0.0, %v1053
      %v1055 = vpop.f32.mrb[0].mxu0
      %1056 = vdwg.mxu0
      %v1057 = vadd.f32 %v952, %v1027
      %v1058 = vadd.f32 %v953, %v1030
      %v1059 = vadd.f32 %v954, %v1035
      %v1060 = vadd.f32 %v955, %v1038
      %v1061 = vadd.f32 %v956, %v1043
      %v1062 = vadd.f32 %v957, %v1046
      %v1063 = vadd.f32 %v958, %v1051
      %v1064 = vadd.f32 %v959, %v1054
      %s1065 = scalar_lea.vmem [#allocation2], 32
      %v1066 = vld [vmem:[%s1065] sm:$0xff]
      %v1067 = vld [vmem:[%s1065 + $0x10] sm:$0xff]
      %v1068 = vld [vmem:[%s1065 + $0x20] sm:$0xff]
      %v1069 = vld [vmem:[%s1065 + $0x30] sm:$0xff]
      %v1070 = vld [vmem:[%s1065 + $0x40] sm:$0xff]
      %v1071 = vld [vmem:[%s1065 + $0x50] sm:$0xff]
      %v1072 = vld [vmem:[%s1065 + $0x60] sm:$0xff]
      %v1073 = vld [vmem:[%s1065 + $0x70] sm:$0xff]
      %v1074 = vpack.c.bf16 %v1067, %v1066
      %v1075 = vpack.c.bf16 %v1069, %v1068
      %v1076 = vpack.c.bf16 %v1071, %v1070
      %v1077 = vpack.c.bf16 %v1073, %v1072
      %v1078 = vld [vmem:[%s2 + $0xc] sm:$0x3]
      %v1080 = vsel %vm425, %v1074, 0
      %v1083 = vsel %vm425, %v1075, 0
      %v1086 = vsel %vm425, %v1076, 0
      %v1089 = vsel %vm425, %v1077, 0
      %v1092 = vsel %vm504, %v1078, 0
      %1094 = vmatprep.subr.bf16.mxu0 0
      %1095 = vmatpush1.bf16.msra.mxu0 %v1092
      %1096 = vmatprep.subr.bf16.mxu0 0
      %1097 = vmatpush1.bf16.msra.mxu0 0
      %1098 = vmatprep.subr.bf16.mxu0 0
      %1099 = vmatpush1.bf16.msra.mxu0 0
      %1100 = vmatprep.subr.bf16.mxu0 0
      %1101 = vmatpush1.bf16.msra.mxu0 0
      %1102 = vmatprep.subr.bf16.mxu0 0
      %1103 = vmatpush1.bf16.msra.mxu0 0
      %1104 = vmatprep.subr.bf16.mxu0 0
      %1105 = vmatpush1.bf16.msra.mxu0 0
      %1106 = vmatprep.subr.bf16.mxu0 0
      %1107 = vmatpush1.bf16.msra.mxu0 0
      %1108 = vmatprep.subr.bf16.mxu0 0
      %1109 = vmatpush1.bf16.msra.mxu0 0
      %1110 = vmatprep.subr.bf16.mxu0 0
      %1111 = vmatpush1.bf16.msra.mxu0 0
      %1112 = vmatprep.subr.bf16.mxu0 0
      %1113 = vmatpush1.bf16.msra.mxu0 0
      %1114 = vmatprep.subr.bf16.mxu0 0
      %1115 = vmatpush1.bf16.msra.mxu0 0
      %1116 = vmatprep.subr.bf16.mxu0 0
      %1117 = vmatpush1.bf16.msra.mxu0 0
      %1118 = vmatprep.subr.bf16.mxu0 0
      %1119 = vmatpush1.bf16.msra.mxu0 0
      %1120 = vmatprep.subr.bf16.mxu0 0
      %1121 = vmatpush1.bf16.msra.mxu0 0
      %1122 = vmatprep.subr.bf16.mxu0 0
      %1123 = vmatpush1.bf16.msra.mxu0 0
      %1124 = vmatprep.subr.bf16.mxu0 0
      %1125 = vmatpush1.bf16.msra.mxu0 0
      %1126 = vmatprep.mubr.bf16.mxu0 0
      %1127 = vmatmul.mubr.bf16.gmra.mrb[0].mxu0 %v1080
      %v1128 = vpop.f32.mrb[0].mxu0
      %v1129 = vadd.f32 0.0, %v1128
      %v1130 = vpop.f32.mrb[0].mxu0
      %v1131 = vpop.f32.mrb[0].mxu0
      %v1132 = vadd.f32 0.0, %v1131
      %v1133 = vpop.f32.mrb[0].mxu0
      %1134 = vmatprep.mubr.bf16.mxu0 0
      %1135 = vmatmul.mubr.bf16.gmra.mrb[0].mxu0 %v1083
      %v1136 = vpop.f32.mrb[0].mxu0
      %v1137 = vadd.f32 0.0, %v1136
      %v1138 = vpop.f32.mrb[0].mxu0
      %v1139 = vpop.f32.mrb[0].mxu0
      %v1140 = vadd.f32 0.0, %v1139
      %v1141 = vpop.f32.mrb[0].mxu0
      %1142 = vmatprep.mubr.bf16.mxu0 0
      %1143 = vmatmul.mubr.bf16.gmra.mrb[0].mxu0 %v1086
      %v1144 = vpop.f32.mrb[0].mxu0
      %v1145 = vadd.f32 0.0, %v1144
      %v1146 = vpop.f32.mrb[0].mxu0
      %v1147 = vpop.f32.mrb[0].mxu0
      %v1148 = vadd.f32 0.0, %v1147
      %v1149 = vpop.f32.mrb[0].mxu0
      %1150 = vmatprep.mubr.bf16.mxu0 0
      %1151 = vmatmul.mubr.bf16.gmra.mrb[0].mxu0 %v1089
      %v1152 = vpop.f32.mrb[0].mxu0
      %v1153 = vadd.f32 0.0, %v1152
      %v1154 = vpop.f32.mrb[0].mxu0
      %v1155 = vpop.f32.mrb[0].mxu0
      %v1156 = vadd.f32 0.0, %v1155
      %v1157 = vpop.f32.mrb[0].mxu0
      %1158 = vdwg.mxu0
      %v1159 = vadd.f32 %v1057, %v1129
      %v1160 = vadd.f32 %v1058, %v1132
      %v1161 = vadd.f32 %v1059, %v1137
      %v1162 = vadd.f32 %v1060, %v1140
      %v1163 = vadd.f32 %v1061, %v1145
      %v1164 = vadd.f32 %v1062, %v1148
      %v1165 = vadd.f32 %v1063, %v1153
      %v1166 = vadd.f32 %v1064, %v1156
      %v1167 = vld [vmem:[%s1065 + $0x1] sm:$0xff]
      %v1168 = vld [vmem:[%s1065 + $0x11] sm:$0xff]
      %v1169 = vld [vmem:[%s1065 + $0x21] sm:$0xff]
      %v1170 = vld [vmem:[%s1065 + $0x31] sm:$0xff]
      %v1171 = vld [vmem:[%s1065 + $0x41] sm:$0xff]
      %v1172 = vld [vmem:[%s1065 + $0x51] sm:$0xff]
      %v1173 = vld [vmem:[%s1065 + $0x61] sm:$0xff]
      %v1174 = vld [vmem:[%s1065 + $0x71] sm:$0xff]
      %v1175 = vpack.c.bf16 %v1168, %v1167
      %v1176 = vpack.c.bf16 %v1170, %v1169
      %v1177 = vpack.c.bf16 %v1172, %v1171
      %v1178 = vpack.c.bf16 %v1174, %v1173
      %v1179 = vld [vmem:[%s2 + $0xc] sm:$0xc]
      %v1181 = vunpack.c.l.b16 %v1179
      %v1182 = vpack.c.b16 %v1181, %v1181
      %v1183 = vrot.slane %v1182, 2
      %v1185 = vsel %vm425, %v1175, 0
      %v1188 = vsel %vm425, %v1176, 0
      %v1191 = vsel %vm425, %v1177, 0
      %v1194 = vsel %vm425, %v1178, 0
      %v1197 = vsel %vm504, %v1183, 0
      %1199 = vmatprep.subr.bf16.mxu0 0
      %1200 = vmatpush1.bf16.msra.mxu0 %v1197
      %1201 = vmatprep.subr.bf16.mxu0 0
      %1202 = vmatpush1.bf16.msra.mxu0 0
      %1203 = vmatprep.subr.bf16.mxu0 0
      %1204 = vmatpush1.bf16.msra.mxu0 0
      %1205 = vmatprep.subr.bf16.mxu0 0
      %1206 = vmatpush1.bf16.msra.mxu0 0
      %1207 = vmatprep.subr.bf16.mxu0 0
      %1208 = vmatpush1.bf16.msra.mxu0 0
      %1209 = vmatprep.subr.bf16.mxu0 0
      %1210 = vmatpush1.bf16.msra.mxu0 0
      %1211 = vmatprep.subr.bf16.mxu0 0
      %1212 = vmatpush1.bf16.msra.mxu0 0
      %1213 = vmatprep.subr.bf16.mxu0 0
      %1214 = vmatpush1.bf16.msra.mxu0 0
      %1215 = vmatprep.subr.bf16.mxu0 0
      %1216 = vmatpush1.bf16.msra.mxu0 0
      %1217 = vmatprep.subr.bf16.mxu0 0
      %1218 = vmatpush1.bf16.msra.mxu0 0
      %1219 = vmatprep.subr.bf16.mxu0 0
      %1220 = vmatpush1.bf16.msra.mxu0 0
      %1221 = vmatprep.subr.bf16.mxu0 0
      %1222 = vmatpush1.bf16.msra.mxu0 0
      %1223 = vmatprep.subr.bf16.mxu0 0
      %1224 = vmatpush1.bf16.msra.mxu0 0
      %1225 = vmatprep.subr.bf16.mxu0 0
      %1226 = vmatpush1.bf16.msra.mxu0 0
      %1227 = vmatprep.subr.bf16.mxu0 0
      %1228 = vmatpush1.bf16.msra.mxu0 0
      %1229 = vmatprep.subr.bf16.mxu0 0
      %1230 = vmatpush1.bf16.msra.mxu0 0
      %1231 = vmatprep.mubr.bf16.mxu0 0
      %1232 = vmatmul.mubr.bf16.gmra.mrb[0].mxu0 %v1185
      %v1233 = vpop.f32.mrb[0].mxu0
      %v1234 = vadd.f32 0.0, %v1233
      %v1235 = vpop.f32.mrb[0].mxu0
      %v1236 = vpop.f32.mrb[0].mxu0
      %v1237 = vadd.f32 0.0, %v1236
      %v1238 = vpop.f32.mrb[0].mxu0
      %1239 = vmatprep.mubr.bf16.mxu0 0
      %1240 = vmatmul.mubr.bf16.gmra.mrb[0].mxu0 %v1188
      %v1241 = vpop.f32.mrb[0].mxu0
      %v1242 = vadd.f32 0.0, %v1241
      %v1243 = vpop.f32.mrb[0].mxu0
      %v1244 = vpop.f32.mrb[0].mxu0
      %v1245 = vadd.f32 0.0, %v1244
      %v1246 = vpop.f32.mrb[0].mxu0
      %1247 = vmatprep.mubr.bf16.mxu0 0
      %1248 = vmatmul.mubr.bf16.gmra.mrb[0].mxu0 %v1191
      %v1249 = vpop.f32.mrb[0].mxu0
      %v1250 = vadd.f32 0.0, %v1249
      %v1251 = vpop.f32.mrb[0].mxu0
      %v1252 = vpop.f32.mrb[0].mxu0
      %v1253 = vadd.f32 0.0, %v1252
      %v1254 = vpop.f32.mrb[0].mxu0
      %1255 = vmatprep.mubr.bf16.mxu0 0
      %1256 = vmatmul.mubr.bf16.gmra.mrb[0].mxu0 %v1194
      %v1257 = vpop.f32.mrb[0].mxu0
      %v1258 = vadd.f32 0.0, %v1257
      %v1259 = vpop.f32.mrb[0].mxu0
      %v1260 = vpop.f32.mrb[0].mxu0
      %v1261 = vadd.f32 0.0, %v1260
      %v1262 = vpop.f32.mrb[0].mxu0
      %1263 = vdwg.mxu0
      %v1264 = vadd.f32 %v1159, %v1234
      %v1265 = vadd.f32 %v1160, %v1237
      %v1266 = vadd.f32 %v1161, %v1242
      %v1267 = vadd.f32 %v1162, %v1245
      %v1268 = vadd.f32 %v1163, %v1250
      %v1269 = vadd.f32 %v1164, %v1253
      %v1270 = vadd.f32 %v1165, %v1258
      %v1271 = vadd.f32 %v1166, %v1261
      %v1272 = vld [vmem:[%s1065 + $0x2] sm:$0xff]
      %v1273 = vld [vmem:[%s1065 + $0x12] sm:$0xff]
      %v1274 = vld [vmem:[%s1065 + $0x22] sm:$0xff]
      %v1275 = vld [vmem:[%s1065 + $0x32] sm:$0xff]
      %v1276 = vld [vmem:[%s1065 + $0x42] sm:$0xff]
      %v1277 = vld [vmem:[%s1065 + $0x52] sm:$0xff]
      %v1278 = vld [vmem:[%s1065 + $0x62] sm:$0xff]
      %v1279 = vld [vmem:[%s1065 + $0x72] sm:$0xff]
      %v1280 = vpack.c.bf16 %v1273, %v1272
      %v1281 = vpack.c.bf16 %v1275, %v1274
      %v1282 = vpack.c.bf16 %v1277, %v1276
      %v1283 = vpack.c.bf16 %v1279, %v1278
      %v1284 = vld [vmem:[%s2 + $0x10] sm:$0x3]
      %v1286 = vsel %vm425, %v1280, 0
      %v1289 = vsel %vm425, %v1281, 0
      %v1292 = vsel %vm425, %v1282, 0
      %v1295 = vsel %vm425, %v1283, 0
      %v1298 = vsel %vm504, %v1284, 0
      %1300 = vmatprep.subr.bf16.mxu0 0
      %1301 = vmatpush1.bf16.msra.mxu0 %v1298
      %1302 = vmatprep.subr.bf16.mxu0 0
      %1303 = vmatpush1.bf16.msra.mxu0 0
      %1304 = vmatprep.subr.bf16.mxu0 0
      %1305 = vmatpush1.bf16.msra.mxu0 0
      %1306 = vmatprep.subr.bf16.mxu0 0
      %1307 = vmatpush1.bf16.msra.mxu0 0
      %1308 = vmatprep.subr.bf16.mxu0 0
      %1309 = vmatpush1.bf16.msra.mxu0 0
      %1310 = vmatprep.subr.bf16.mxu0 0
      %1311 = vmatpush1.bf16.msra.mxu0 0
      %1312 = vmatprep.subr.bf16.mxu0 0
      %1313 = vmatpush1.bf16.msra.mxu0 0
      %1314 = vmatprep.subr.bf16.mxu0 0
      %1315 = vmatpush1.bf16.msra.mxu0 0
      %1316 = vmatprep.subr.bf16.mxu0 0
      %1317 = vmatpush1.bf16.msra.mxu0 0
      %1318 = vmatprep.subr.bf16.mxu0 0
      %1319 = vmatpush1.bf16.msra.mxu0 0
      %1320 = vmatprep.subr.bf16.mxu0 0
      %1321 = vmatpush1.bf16.msra.mxu0 0
      %1322 = vmatprep.subr.bf16.mxu0 0
      %1323 = vmatpush1.bf16.msra.mxu0 0
      %1324 = vmatprep.subr.bf16.mxu0 0
      %1325 = vmatpush1.bf16.msra.mxu0 0
      %1326 = vmatprep.subr.bf16.mxu0 0
      %1327 = vmatpush1.bf16.msra.mxu0 0
      %1328 = vmatprep.subr.bf16.mxu0 0
      %1329 = vmatpush1.bf16.msra.mxu0 0
      %1330 = vmatprep.subr.bf16.mxu0 0
      %1331 = vmatpush1.bf16.msra.mxu0 0
      %1332 = vmatprep.mubr.bf16.mxu0 0
      %1333 = vmatmul.mubr.bf16.gmra.mrb[0].mxu0 %v1286
      %v1334 = vpop.f32.mrb[0].mxu0
      %v1335 = vadd.f32 0.0, %v1334
      %v1336 = vpop.f32.mrb[0].mxu0
      %v1337 = vpop.f32.mrb[0].mxu0
      %v1338 = vadd.f32 0.0, %v1337
      %v1339 = vpop.f32.mrb[0].mxu0
      %1340 = vmatprep.mubr.bf16.mxu0 0
      %1341 = vmatmul.mubr.bf16.gmra.mrb[0].mxu0 %v1289
      %v1342 = vpop.f32.mrb[0].mxu0
      %v1343 = vadd.f32 0.0, %v1342
      %v1344 = vpop.f32.mrb[0].mxu0
      %v1345 = vpop.f32.mrb[0].mxu0
      %v1346 = vadd.f32 0.0, %v1345
      %v1347 = vpop.f32.mrb[0].mxu0
      %1348 = vmatprep.mubr.bf16.mxu0 0
      %1349 = vmatmul.mubr.bf16.gmra.mrb[0].mxu0 %v1292
      %v1350 = vpop.f32.mrb[0].mxu0
      %v1351 = vadd.f32 0.0, %v1350
      %v1352 = vpop.f32.mrb[0].mxu0
      %v1353 = vpop.f32.mrb[0].mxu0
      %v1354 = vadd.f32 0.0, %v1353
      %v1355 = vpop.f32.mrb[0].mxu0
      %1356 = vmatprep.mubr.bf16.mxu0 0
      %1357 = vmatmul.mubr.bf16.gmra.mrb[0].mxu0 %v1295
      %v1358 = vpop.f32.mrb[0].mxu0
      %v1359 = vadd.f32 0.0, %v1358
      %v1360 = vpop.f32.mrb[0].mxu0
      %v1361 = vpop.f32.mrb[0].mxu0
      %v1362 = vadd.f32 0.0, %v1361
      %v1363 = vpop.f32.mrb[0].mxu0
      %1364 = vdwg.mxu0
      %v1365 = vadd.f32 %v1264, %v1335
      %v1366 = vadd.f32 %v1265, %v1338
      %v1367 = vadd.f32 %v1266, %v1343
      %v1368 = vadd.f32 %v1267, %v1346
      %v1369 = vadd.f32 %v1268, %v1351
      %v1370 = vadd.f32 %v1269, %v1354
      %v1371 = vadd.f32 %v1270, %v1359
      %v1372 = vadd.f32 %v1271, %v1362
      %v1373 = vld [vmem:[%s4] sm:$0x1]
      %v1375 = vlaneseq
      %v1376 = vshrl.u32 %v1375, 7
      %v1377 = vsub.s32 0, %v1376
      %v1378 = vrot.slane %v1373, %v1377
      %v1380 = vmul.f32 %v1365, %v1378
      %v1381 = vmul.f32 %v1366, %v1378
      %v1382 = vmul.f32 %v1367, %v1378
      %v1383 = vmul.f32 %v1368, %v1378
      %v1384 = vmul.f32 %v1369, %v1378
      %v1385 = vmul.f32 %v1370, %v1378
      %v1386 = vmul.f32 %v1371, %v1378
      %v1387 = vmul.f32 %v1372, %v1378
      %v1388 = vld [vmem:[%s5] sm:$0x1]
      %v1390 = vlaneseq
      %v1391 = vshrl.u32 %v1390, 7
      %v1392 = vsub.s32 0, %v1391
      %v1393 = vrot.slane %v1388, %v1392
      %v1395 = vadd.f32 %v1380, %v1393
      %v1396 = vadd.f32 %v1381, %v1393
      %v1397 = vadd.f32 %v1382, %v1393
      %v1398 = vadd.f32 %v1383, %v1393
      %v1399 = vadd.f32 %v1384, %v1393
      %v1400 = vadd.f32 %v1385, %v1393
      %v1401 = vadd.f32 %v1386, %v1393
      %v1402 = vadd.f32 %v1387, %v1393
      %v1403 = vmax.f32 %v1395, 0.0
      %v1404 = vmax.f32 %v1396, 0.0
      %v1405 = vmax.f32 %v1397, 0.0
      %v1406 = vmax.f32 %v1398, 0.0
      %v1407 = vmax.f32 %v1399, 0.0
      %v1408 = vmax.f32 %v1400, 0.0
      %v1409 = vmax.f32 %v1401, 0.0
      %v1410 = vmax.f32 %v1402, 0.0
      %vm1411 = vcmask 64512
      %1412 = vst.msk [vmem:[#allocation3] sm:$0xff] %vm1411, 0.0
      %vm1413 = vcmask 58368
      %1414 = vst.msk [vmem:[#allocation3 + $0x8] sm:$0x3] %vm1413, 0.0
      %s1415 = scalar_lea.vmem [#allocation3], 144
      %1416 = vst.msk [vmem:[%s1415] sm:$0xff] %vm1411, 0.0
      %1417 = vst.msk [vmem:[%s1415 + $0x8] sm:$0x3] %vm1413, 0.0
      %vm1418 = vcmask 57344
      %1419 = vst.msk [vmem:[#allocation3] sm:$0x1] %vm1418, 0.0
      %1420 = vst.msk [vmem:[#allocation3 + $0x10] sm:$0x1] %vm1418, 0.0
      %1421 = vst.msk [vmem:[#allocation3 + $0x20] sm:$0x1] %vm1418, 0.0
      %1422 = vst.msk [vmem:[#allocation3 + $0x30] sm:$0x1] %vm1418, 0.0
      %1423 = vst.msk [vmem:[#allocation3 + $0x40] sm:$0x1] %vm1418, 0.0
      %1424 = vst.msk [vmem:[#allocation3 + $0x50] sm:$0x1] %vm1418, 0.0
      %1425 = vst.msk [vmem:[#allocation3 + $0x60] sm:$0x1] %vm1418, 0.0
      %1426 = vst.msk [vmem:[#allocation3 + $0x70] sm:$0x1] %vm1418, 0.0
      %1427 = vst.msk [vmem:[#allocation3 + $0x80] sm:$0x1] %vm1418, 0.0
      %1428 = vst.msk [vmem:[#allocation3 + $0x90] sm:$0x1] %vm1418, 0.0
      %1429 = vst.msk [vmem:[#allocation3 + $0x9] sm:$0x1] %vm1418, 0.0
      %1430 = vst.msk [vmem:[#allocation3 + $0x19] sm:$0x1] %vm1418, 0.0
      %1431 = vst.msk [vmem:[#allocation3 + $0x29] sm:$0x1] %vm1418, 0.0
      %1432 = vst.msk [vmem:[#allocation3 + $0x39] sm:$0x1] %vm1418, 0.0
      %1433 = vst.msk [vmem:[#allocation3 + $0x49] sm:$0x1] %vm1418, 0.0
      %1434 = vst.msk [vmem:[#allocation3 + $0x59] sm:$0x1] %vm1418, 0.0
      %1435 = vst.msk [vmem:[#allocation3 + $0x69] sm:$0x1] %vm1418, 0.0
      %1436 = vst.msk [vmem:[#allocation3 + $0x79] sm:$0x1] %vm1418, 0.0
      %1437 = vst.msk [vmem:[#allocation3 + $0x89] sm:$0x1] %vm1418, 0.0
      %1438 = vst.msk [vmem:[#allocation3 + $0x99] sm:$0x1] %vm1418, 0.0
      %s1439 = scalar_lea.vmem [#allocation3], 16
      %1440 = vst.msk [vmem:[%s1439 + $0x1] sm:$0xff] %vm1411, %v1403
      %1441 = vst.msk [vmem:[%s1439 + $0x11] sm:$0xff] %vm1411, %v1404
      %1442 = vst.msk [vmem:[%s1439 + $0x21] sm:$0xff] %vm1411, %v1405
      %1443 = vst.msk [vmem:[%s1439 + $0x31] sm:$0xff] %vm1411, %v1406
      %1444 = vst.msk [vmem:[%s1439 + $0x41] sm:$0xff] %vm1411, %v1407
      %1445 = vst.msk [vmem:[%s1439 + $0x51] sm:$0xff] %vm1411, %v1408
      %1446 = vst.msk [vmem:[%s1439 + $0x61] sm:$0xff] %vm1411, %v1409
      %1447 = vst.msk [vmem:[%s1439 + $0x71] sm:$0xff] %vm1411, %v1410
      %v1448 = vld [vmem:[#allocation3] sm:$0xff]
      %v1449 = vld [vmem:[#allocation3 + $0x10] sm:$0xff]
      %v1450 = vld [vmem:[#allocation3 + $0x20] sm:$0xff]
      %v1451 = vld [vmem:[#allocation3 + $0x30] sm:$0xff]
      %v1452 = vld [vmem:[#allocation3 + $0x40] sm:$0xff]
      %v1453 = vld [vmem:[#allocation3 + $0x50] sm:$0xff]
      %v1454 = vld [vmem:[#allocation3 + $0x60] sm:$0xff]
      %v1455 = vld [vmem:[#allocation3 + $0x70] sm:$0xff]
      %v1456 = vpack.c.bf16 %v1449, %v1448
      %v1457 = vpack.c.bf16 %v1451, %v1450
      %v1458 = vpack.c.bf16 %v1453, %v1452
      %v1459 = vpack.c.bf16 %v1455, %v1454
      %v1460 = vld [vmem:[%s3] sm:$0xf]
      %v1461 = vld [vmem:[#allocation3 + $0x1] sm:$0xff]
      %v1462 = vld [vmem:[#allocation3 + $0x11] sm:$0xff]
      %v1463 = vld [vmem:[#allocation3 + $0x21] sm:$0xff]
      %v1464 = vld [vmem:[#allocation3 + $0x31] sm:$0xff]
      %v1465 = vld [vmem:[#allocation3 + $0x41] sm:$0xff]
      %v1466 = vld [vmem:[#allocation3 + $0x51] sm:$0xff]
      %v1467 = vld [vmem:[#allocation3 + $0x61] sm:$0xff]
      %v1468 = vld [vmem:[#allocation3 + $0x71] sm:$0xff]
      %v1469 = vpack.c.bf16 %v1462, %v1461
      %v1470 = vpack.c.bf16 %v1464, %v1463
      %v1471 = vpack.c.bf16 %v1466, %v1465
      %v1472 = vpack.c.bf16 %v1468, %v1467
      %v1473 = vld [vmem:[%s3 + $0x4] sm:$0xf]
      %v1475 = vsel %vm1411, %v1469, 0
      %v1478 = vsel %vm1411, %v1470, 0
      %v1481 = vsel %vm1411, %v1471, 0
      %v1484 = vsel %vm1411, %v1472, 0
      %vm1486 = vcmask 1043456
      %v1488 = vsel %vm1486, %v1473, 0
      %1490 = vmatprep.subr.bf16.mxu0 0
      %1491 = vmatpush1.bf16.msra.mxu0 %v1488
      %1492 = vmatprep.subr.bf16.mxu0 0
      %1493 = vmatpush1.bf16.msra.mxu0 0
      %1494 = vmatprep.subr.bf16.mxu0 0
      %1495 = vmatpush1.bf16.msra.mxu0 0
      %1496 = vmatprep.subr.bf16.mxu0 0
      %1497 = vmatpush1.bf16.msra.mxu0 0
      %1498 = vmatprep.subr.bf16.mxu0 0
      %1499 = vmatpush1.bf16.msra.mxu0 0
      %1500 = vmatprep.subr.bf16.mxu0 0
      %1501 = vmatpush1.bf16.msra.mxu0 0
      %1502 = vmatprep.subr.bf16.mxu0 0
      %1503 = vmatpush1.bf16.msra.mxu0 0
      %1504 = vmatprep.subr.bf16.mxu0 0
      %1505 = vmatpush1.bf16.msra.mxu0 0
      %1506 = vmatprep.subr.bf16.mxu0 0
      %1507 = vmatpush1.bf16.msra.mxu0 0
      %1508 = vmatprep.subr.bf16.mxu0 0
      %1509 = vmatpush1.bf16.msra.mxu0 0
      %1510 = vmatprep.subr.bf16.mxu0 0
      %1511 = vmatpush1.bf16.msra.mxu0 0
      %1512 = vmatprep.subr.bf16.mxu0 0
      %1513 = vmatpush1.bf16.msra.mxu0 0
      %1514 = vmatprep.subr.bf16.mxu0 0
      %1515 = vmatpush1.bf16.msra.mxu0 0
      %1516 = vmatprep.subr.bf16.mxu0 0
      %1517 = vmatpush1.bf16.msra.mxu0 0
      %1518 = vmatprep.subr.bf16.mxu0 0
      %1519 = vmatpush1.bf16.msra.mxu0 0
      %1520 = vmatprep.subr.bf16.mxu0 0
      %1521 = vmatpush1.bf16.msra.mxu0 0
      %1522 = vmatprep.mubr.bf16.mxu0 0
      %1523 = vmatmul.mubr.bf16.gmra.mrb[0].mxu0 %v1475
      %v1524 = vpop.f32.mrb[0].mxu0
      %v1525 = vadd.f32 0.0, %v1524
      %v1526 = vpop.f32.mrb[0].mxu0
      %v1527 = vpop.f32.mrb[0].mxu0
      %v1528 = vadd.f32 0.0, %v1527
      %v1529 = vpop.f32.mrb[0].mxu0
      %1530 = vmatprep.mubr.bf16.mxu0 0
      %1531 = vmatmul.mubr.bf16.gmra.mrb[0].mxu0 %v1478
      %v1532 = vpop.f32.mrb[0].mxu0
      %v1533 = vadd.f32 0.0, %v1532
      %v1534 = vpop.f32.mrb[0].mxu0
      %v1535 = vpop.f32.mrb[0].mxu0
      %v1536 = vadd.f32 0.0, %v1535
      %v1537 = vpop.f32.mrb[0].mxu0
      %1538 = vmatprep.mubr.bf16.mxu0 0
      %1539 = vmatmul.mubr.bf16.gmra.mrb[0].mxu0 %v1481
      %v1540 = vpop.f32.mrb[0].mxu0
      %v1541 = vadd.f32 0.0, %v1540
      %v1542 = vpop.f32.mrb[0].mxu0
      %v1543 = vpop.f32.mrb[0].mxu0
      %v1544 = vadd.f32 0.0, %v1543
      %v1545 = vpop.f32.mrb[0].mxu0
      %1546 = vmatprep.mubr.bf16.mxu0 0
      %1547 = vmatmul.mubr.bf16.gmra.mrb[0].mxu0 %v1484
      %v1548 = vpop.f32.mrb[0].mxu0
      %v1549 = vadd.f32 0.0, %v1548
      %v1550 = vpop.f32.mrb[0].mxu0
      %v1551 = vpop.f32.mrb[0].mxu0
      %v1552 = vadd.f32 0.0, %v1551
      %v1553 = vpop.f32.mrb[0].mxu0
      %1554 = vdwg.mxu0
      %v1556 = vsel %vm1411, %v1456, 0
      %v1559 = vsel %vm1411, %v1457, 0
      %v1562 = vsel %vm1411, %v1458, 0
      %v1565 = vsel %vm1411, %v1459, 0
      %v1568 = vsel %vm1486, %v1460, 0
      %1570 = vmatprep.subr.bf16.mxu0 0
      %1571 = vmatpush1.bf16.msra.mxu0 %v1568
      %1572 = vmatprep.subr.bf16.mxu0 0
      %1573 = vmatpush1.bf16.msra.mxu0 0
      %1574 = vmatprep.subr.bf16.mxu0 0
      %1575 = vmatpush1.bf16.msra.mxu0 0
      %1576 = vmatprep.subr.bf16.mxu0 0
      %1577 = vmatpush1.bf16.msra.mxu0 0
      %1578 = vmatprep.subr.bf16.mxu0 0
      %1579 = vmatpush1.bf16.msra.mxu0 0
      %1580 = vmatprep.subr.bf16.mxu0 0
      %1581 = vmatpush1.bf16.msra.mxu0 0
      %1582 = vmatprep.subr.bf16.mxu0 0
      %1583 = vmatpush1.bf16.msra.mxu0 0
      %1584 = vmatprep.subr.bf16.mxu0 0
      %1585 = vmatpush1.bf16.msra.mxu0 0
      %1586 = vmatprep.subr.bf16.mxu0 0
      %1587 = vmatpush1.bf16.msra.mxu0 0
      %1588 = vmatprep.subr.bf16.mxu0 0
      %1589 = vmatpush1.bf16.msra.mxu0 0
      %1590 = vmatprep.subr.bf16.mxu0 0
      %1591 = vmatpush1.bf16.msra.mxu0 0
      %1592 = vmatprep.subr.bf16.mxu0 0
      %1593 = vmatpush1.bf16.msra.mxu0 0
      %1594 = vmatprep.subr.bf16.mxu0 0
      %1595 = vmatpush1.bf16.msra.mxu0 0
      %1596 = vmatprep.subr.bf16.mxu0 0
      %1597 = vmatpush1.bf16.msra.mxu0 0
      %1598 = vmatprep.subr.bf16.mxu0 0
      %1599 = vmatpush1.bf16.msra.mxu0 0
      %1600 = vmatprep.subr.bf16.mxu0 0
      %1601 = vmatpush1.bf16.msra.mxu0 0
      %1602 = vmatprep.mubr.bf16.mxu0 0
      %1603 = vmatmul.mubr.bf16.gmra.mrb[0].mxu0 %v1556
      %v1604 = vpop.f32.mrb[0].mxu0
      %v1605 = vadd.f32 %v1525, %v1604
      %v1606 = vpop.f32.mrb[0].mxu0
      %v1607 = vpop.f32.mrb[0].mxu0
      %v1608 = vadd.f32 %v1528, %v1607
      %v1609 = vpop.f32.mrb[0].mxu0
      %1610 = vmatprep.mubr.bf16.mxu0 0
      %1611 = vmatmul.mubr.bf16.gmra.mrb[0].mxu0 %v1559
      %v1612 = vpop.f32.mrb[0].mxu0
      %v1613 = vadd.f32 %v1533, %v1612
      %v1614 = vpop.f32.mrb[0].mxu0
      %v1615 = vpop.f32.mrb[0].mxu0
      %v1616 = vadd.f32 %v1536, %v1615
      %v1617 = vpop.f32.mrb[0].mxu0
      %1618 = vmatprep.mubr.bf16.mxu0 0
      %1619 = vmatmul.mubr.bf16.gmra.mrb[0].mxu0 %v1562
      %v1620 = vpop.f32.mrb[0].mxu0
      %v1621 = vadd.f32 %v1541, %v1620
      %v1622 = vpop.f32.mrb[0].mxu0
      %v1623 = vpop.f32.mrb[0].mxu0
      %v1624 = vadd.f32 %v1544, %v1623
      %v1625 = vpop.f32.mrb[0].mxu0
      %1626 = vmatprep.mubr.bf16.mxu0 0
      %1627 = vmatmul.mubr.bf16.gmra.mrb[0].mxu0 %v1565
      %v1628 = vpop.f32.mrb[0].mxu0
      %v1629 = vadd.f32 %v1549, %v1628
      %v1630 = vpop.f32.mrb[0].mxu0
      %v1631 = vpop.f32.mrb[0].mxu0
      %v1632 = vadd.f32 %v1552, %v1631
      %v1633 = vpop.f32.mrb[0].mxu0
      %1634 = vdwg.mxu0
      %v1635 = vld [vmem:[#allocation3 + $0x2] sm:$0xff]
      %v1636 = vld [vmem:[#allocation3 + $0x12] sm:$0xff]
      %v1637 = vld [vmem:[#allocation3 + $0x22] sm:$0xff]
      %v1638 = vld [vmem:[#allocation3 + $0x32] sm:$0xff]
      %v1639 = vld [vmem:[#allocation3 + $0x42] sm:$0xff]
      %v1640 = vld [vmem:[#allocation3 + $0x52] sm:$0xff]
      %v1641 = vld [vmem:[#allocation3 + $0x62] sm:$0xff]
      %v1642 = vld [vmem:[#allocation3 + $0x72] sm:$0xff]
      %v1643 = vpack.c.bf16 %v1636, %v1635
      %v1644 = vpack.c.bf16 %v1638, %v1637
      %v1645 = vpack.c.bf16 %v1640, %v1639
      %v1646 = vpack.c.bf16 %v1642, %v1641
      %v1647 = vld [vmem:[%s3 + $0x8] sm:$0xf]
      %v1649 = vsel %vm1411, %v1643, 0
      %v1652 = vsel %vm1411, %v1644, 0
      %v1655 = vsel %vm1411, %v1645, 0
      %v1658 = vsel %vm1411, %v1646, 0
      %v1661 = vsel %vm1486, %v1647, 0
      %1663 = vmatprep.subr.bf16.mxu0 0
      %1664 = vmatpush1.bf16.msra.mxu0 %v1661
      %1665 = vmatprep.subr.bf16.mxu0 0
      %1666 = vmatpush1.bf16.msra.mxu0 0
      %1667 = vmatprep.subr.bf16.mxu0 0
      %1668 = vmatpush1.bf16.msra.mxu0 0
      %1669 = vmatprep.subr.bf16.mxu0 0
      %1670 = vmatpush1.bf16.msra.mxu0 0
      %1671 = vmatprep.subr.bf16.mxu0 0
      %1672 = vmatpush1.bf16.msra.mxu0 0
      %1673 = vmatprep.subr.bf16.mxu0 0
      %1674 = vmatpush1.bf16.msra.mxu0 0
      %1675 = vmatprep.subr.bf16.mxu0 0
      %1676 = vmatpush1.bf16.msra.mxu0 0
      %1677 = vmatprep.subr.bf16.mxu0 0
      %1678 = vmatpush1.bf16.msra.mxu0 0
      %1679 = vmatprep.subr.bf16.mxu0 0
      %1680 = vmatpush1.bf16.msra.mxu0 0
      %1681 = vmatprep.subr.bf16.mxu0 0
      %1682 = vmatpush1.bf16.msra.mxu0 0
      %1683 = vmatprep.subr.bf16.mxu0 0
      %1684 = vmatpush1.bf16.msra.mxu0 0
      %1685 = vmatprep.subr.bf16.mxu0 0
      %1686 = vmatpush1.bf16.msra.mxu0 0
      %1687 = vmatprep.subr.bf16.mxu0 0
      %1688 = vmatpush1.bf16.msra.mxu0 0
      %1689 = vmatprep.subr.bf16.mxu0 0
      %1690 = vmatpush1.bf16.msra.mxu0 0
      %1691 = vmatprep.subr.bf16.mxu0 0
      %1692 = vmatpush1.bf16.msra.mxu0 0
      %1693 = vmatprep.subr.bf16.mxu0 0
      %1694 = vmatpush1.bf16.msra.mxu0 0
      %1695 = vmatprep.mubr.bf16.mxu0 0
      %1696 = vmatmul.mubr.bf16.gmra.mrb[0].mxu0 %v1649
      %v1697 = vpop.f32.mrb[0].mxu0
      %v1698 = vadd.f32 0.0, %v1697
      %v1699 = vpop.f32.mrb[0].mxu0
      %v1700 = vpop.f32.mrb[0].mxu0
      %v1701 = vadd.f32 0.0, %v1700
      %v1702 = vpop.f32.mrb[0].mxu0
      %1703 = vmatprep.mubr.bf16.mxu0 0
      %1704 = vmatmul.mubr.bf16.gmra.mrb[0].mxu0 %v1652
      %v1705 = vpop.f32.mrb[0].mxu0
      %v1706 = vadd.f32 0.0, %v1705
      %v1707 = vpop.f32.mrb[0].mxu0
      %v1708 = vpop.f32.mrb[0].mxu0
      %v1709 = vadd.f32 0.0, %v1708
      %v1710 = vpop.f32.mrb[0].mxu0
      %1711 = vmatprep.mubr.bf16.mxu0 0
      %1712 = vmatmul.mubr.bf16.gmra.mrb[0].mxu0 %v1655
      %v1713 = vpop.f32.mrb[0].mxu0
      %v1714 = vadd.f32 0.0, %v1713
      %v1715 = vpop.f32.mrb[0].mxu0
      %v1716 = vpop.f32.mrb[0].mxu0
      %v1717 = vadd.f32 0.0, %v1716
      %v1718 = vpop.f32.mrb[0].mxu0
      %1719 = vmatprep.mubr.bf16.mxu0 0
      %1720 = vmatmul.mubr.bf16.gmra.mrb[0].mxu0 %v1658
      %v1721 = vpop.f32.mrb[0].mxu0
      %v1722 = vadd.f32 0.0, %v1721
      %v1723 = vpop.f32.mrb[0].mxu0
      %v1724 = vpop.f32.mrb[0].mxu0
      %v1725 = vadd.f32 0.0, %v1724
      %v1726 = vpop.f32.mrb[0].mxu0
      %1727 = vdwg.mxu0
      %v1728 = vadd.f32 %v1605, %v1698
      %v1729 = vadd.f32 %v1608, %v1701
      %v1730 = vadd.f32 %v1613, %v1706
      %v1731 = vadd.f32 %v1616, %v1709
      %v1732 = vadd.f32 %v1621, %v1714
      %v1733 = vadd.f32 %v1624, %v1717
      %v1734 = vadd.f32 %v1629, %v1722
      %v1735 = vadd.f32 %v1632, %v1725
      %v1736 = vld [vmem:[%s1439] sm:$0xff]
      %v1737 = vld [vmem:[%s1439 + $0x10] sm:$0xff]
      %v1738 = vld [vmem:[%s1439 + $0x20] sm:$0xff]
      %v1739 = vld [vmem:[%s1439 + $0x30] sm:$0xff]
      %v1740 = vld [vmem:[%s1439 + $0x40] sm:$0xff]
      %v1741 = vld [vmem:[%s1439 + $0x50] sm:$0xff]
      %v1742 = vld [vmem:[%s1439 + $0x60] sm:$0xff]
      %v1743 = vld [vmem:[%s1439 + $0x70] sm:$0xff]
      %v1744 = vpack.c.bf16 %v1737, %v1736
      %v1745 = vpack.c.bf16 %v1739, %v1738
      %v1746 = vpack.c.bf16 %v1741, %v1740
      %v1747 = vpack.c.bf16 %v1743, %v1742
      %v1748 = vld [vmem:[%s3 + $0xc] sm:$0xf]
      %v1750 = vsel %vm1411, %v1744, 0
      %v1753 = vsel %vm1411, %v1745, 0
      %v1756 = vsel %vm1411, %v1746, 0
      %v1759 = vsel %vm1411, %v1747, 0
      %v1762 = vsel %vm1486, %v1748, 0
      %1764 = vmatprep.subr.bf16.mxu0 0
      %1765 = vmatpush1.bf16.msra.mxu0 %v1762
      %1766 = vmatprep.subr.bf16.mxu0 0
      %1767 = vmatpush1.bf16.msra.mxu0 0
      %1768 = vmatprep.subr.bf16.mxu0 0
      %1769 = vmatpush1.bf16.msra.mxu0 0
      %1770 = vmatprep.subr.bf16.mxu0 0
      %1771 = vmatpush1.bf16.msra.mxu0 0
      %1772 = vmatprep.subr.bf16.mxu0 0
      %1773 = vmatpush1.bf16.msra.mxu0 0
      %1774 = vmatprep.subr.bf16.mxu0 0
      %1775 = vmatpush1.bf16.msra.mxu0 0
      %1776 = vmatprep.subr.bf16.mxu0 0
      %1777 = vmatpush1.bf16.msra.mxu0 0
      %1778 = vmatprep.subr.bf16.mxu0 0
      %1779 = vmatpush1.bf16.msra.mxu0 0
      %1780 = vmatprep.subr.bf16.mxu0 0
      %1781 = vmatpush1.bf16.msra.mxu0 0
      %1782 = vmatprep.subr.bf16.mxu0 0
      %1783 = vmatpush1.bf16.msra.mxu0 0
      %1784 = vmatprep.subr.bf16.mxu0 0
      %1785 = vmatpush1.bf16.msra.mxu0 0
      %1786 = vmatprep.subr.bf16.mxu0 0
      %1787 = vmatpush1.bf16.msra.mxu0 0
      %1788 = vmatprep.subr.bf16.mxu0 0
      %1789 = vmatpush1.bf16.msra.mxu0 0
      %1790 = vmatprep.subr.bf16.mxu0 0
      %1791 = vmatpush1.bf16.msra.mxu0 0
      %1792 = vmatprep.subr.bf16.mxu0 0
      %1793 = vmatpush1.bf16.msra.mxu0 0
      %1794 = vmatprep.subr.bf16.mxu0 0
      %1795 = vmatpush1.bf16.msra.mxu0 0
      %1796 = vmatprep.mubr.bf16.mxu0 0
      %1797 = vmatmul.mubr.bf16.gmra.mrb[0].mxu0 %v1750
      %v1798 = vpop.f32.mrb[0].mxu0
      %v1799 = vadd.f32 0.0, %v1798
      %v1800 = vpop.f32.mrb[0].mxu0
      %v1801 = vpop.f32.mrb[0].mxu0
      %v1802 = vadd.f32 0.0, %v1801
      %v1803 = vpop.f32.mrb[0].mxu0
      %1804 = vmatprep.mubr.bf16.mxu0 0
      %1805 = vmatmul.mubr.bf16.gmra.mrb[0].mxu0 %v1753
      %v1806 = vpop.f32.mrb[0].mxu0
      %v1807 = vadd.f32 0.0, %v1806
      %v1808 = vpop.f32.mrb[0].mxu0
      %v1809 = vpop.f32.mrb[0].mxu0
      %v1810 = vadd.f32 0.0, %v1809
      %v1811 = vpop.f32.mrb[0].mxu0
      %1812 = vmatprep.mubr.bf16.mxu0 0
      %1813 = vmatmul.mubr.bf16.gmra.mrb[0].mxu0 %v1756
      %v1814 = vpop.f32.mrb[0].mxu0
      %v1815 = vadd.f32 0.0, %v1814
      %v1816 = vpop.f32.mrb[0].mxu0
      %v1817 = vpop.f32.mrb[0].mxu0
      %v1818 = vadd.f32 0.0, %v1817
      %v1819 = vpop.f32.mrb[0].mxu0
      %1820 = vmatprep.mubr.bf16.mxu0 0
      %1821 = vmatmul.mubr.bf16.gmra.mrb[0].mxu0 %v1759
      %v1822 = vpop.f32.mrb[0].mxu0
      %v1823 = vadd.f32 0.0, %v1822
      %v1824 = vpop.f32.mrb[0].mxu0
      %v1825 = vpop.f32.mrb[0].mxu0
      %v1826 = vadd.f32 0.0, %v1825
      %v1827 = vpop.f32.mrb[0].mxu0
      %1828 = vdwg.mxu0
      %v1829 = vadd.f32 %v1728, %v1799
      %v1830 = vadd.f32 %v1729, %v1802
      %v1831 = vadd.f32 %v1730, %v1807
      %v1832 = vadd.f32 %v1731, %v1810
      %v1833 = vadd.f32 %v1732, %v1815
      %v1834 = vadd.f32 %v1733, %v1818
      %v1835 = vadd.f32 %v1734, %v1823
      %v1836 = vadd.f32 %v1735, %v1826
      %v1837 = vld [vmem:[%s1439 + $0x1] sm:$0xff]
      %v1838 = vld [vmem:[%s1439 + $0x11] sm:$0xff]
      %v1839 = vld [vmem:[%s1439 + $0x21] sm:$0xff]
      %v1840 = vld [vmem:[%s1439 + $0x31] sm:$0xff]
      %v1841 = vld [vmem:[%s1439 + $0x41] sm:$0xff]
      %v1842 = vld [vmem:[%s1439 + $0x51] sm:$0xff]
      %v1843 = vld [vmem:[%s1439 + $0x61] sm:$0xff]
      %v1844 = vld [vmem:[%s1439 + $0x71] sm:$0xff]
      %v1845 = vpack.c.bf16 %v1838, %v1837
      %v1846 = vpack.c.bf16 %v1840, %v1839
      %v1847 = vpack.c.bf16 %v1842, %v1841
      %v1848 = vpack.c.bf16 %v1844, %v1843
      %v1849 = vld [vmem:[%s3 + $0x10] sm:$0xf]
      %v1851 = vsel %vm1411, %v1845, 0
      %v1854 = vsel %vm1411, %v1846, 0
      %v1857 = vsel %vm1411, %v1847, 0
      %v1860 = vsel %vm1411, %v1848, 0
      %v1863 = vsel %vm1486, %v1849, 0
      %1865 = vmatprep.subr.bf16.mxu0 0
      %1866 = vmatpush1.bf16.msra.mxu0 %v1863
      %1867 = vmatprep.subr.bf16.mxu0 0
      %1868 = vmatpush1.bf16.msra.mxu0 0
      %1869 = vmatprep.subr.bf16.mxu0 0
      %1870 = vmatpush1.bf16.msra.mxu0 0
      %1871 = vmatprep.subr.bf16.mxu0 0
      %1872 = vmatpush1.bf16.msra.mxu0 0
      %1873 = vmatprep.subr.bf16.mxu0 0
      %1874 = vmatpush1.bf16.msra.mxu0 0
      %1875 = vmatprep.subr.bf16.mxu0 0
      %1876 = vmatpush1.bf16.msra.mxu0 0
      %1877 = vmatprep.subr.bf16.mxu0 0
      %1878 = vmatpush1.bf16.msra.mxu0 0
      %1879 = vmatprep.subr.bf16.mxu0 0
      %1880 = vmatpush1.bf16.msra.mxu0 0
      %1881 = vmatprep.subr.bf16.mxu0 0
      %1882 = vmatpush1.bf16.msra.mxu0 0
      %1883 = vmatprep.subr.bf16.mxu0 0
      %1884 = vmatpush1.bf16.msra.mxu0 0
      %1885 = vmatprep.subr.bf16.mxu0 0
      %1886 = vmatpush1.bf16.msra.mxu0 0
      %1887 = vmatprep.subr.bf16.mxu0 0
      %1888 = vmatpush1.bf16.msra.mxu0 0
      %1889 = vmatprep.subr.bf16.mxu0 0
      %1890 = vmatpush1.bf16.msra.mxu0 0
      %1891 = vmatprep.subr.bf16.mxu0 0
      %1892 = vmatpush1.bf16.msra.mxu0 0
      %1893 = vmatprep.subr.bf16.mxu0 0
      %1894 = vmatpush1.bf16.msra.mxu0 0
      %1895 = vmatprep.subr.bf16.mxu0 0
      %1896 = vmatpush1.bf16.msra.mxu0 0
      %1897 = vmatprep.mubr.bf16.mxu0 0
      %1898 = vmatmul.mubr.bf16.gmra.mrb[0].mxu0 %v1851
      %v1899 = vpop.f32.mrb[0].mxu0
      %v1900 = vadd.f32 0.0, %v1899
      %v1901 = vpop.f32.mrb[0].mxu0
      %v1902 = vpop.f32.mrb[0].mxu0
      %v1903 = vadd.f32 0.0, %v1902
      %v1904 = vpop.f32.mrb[0].mxu0
      %1905 = vmatprep.mubr.bf16.mxu0 0
      %1906 = vmatmul.mubr.bf16.gmra.mrb[0].mxu0 %v1854
      %v1907 = vpop.f32.mrb[0].mxu0
      %v1908 = vadd.f32 0.0, %v1907
      %v1909 = vpop.f32.mrb[0].mxu0
      %v1910 = vpop.f32.mrb[0].mxu0
      %v1911 = vadd.f32 0.0, %v1910
      %v1912 = vpop.f32.mrb[0].mxu0
      %1913 = vmatprep.mubr.bf16.mxu0 0
      %1914 = vmatmul.mubr.bf16.gmra.mrb[0].mxu0 %v1857
      %v1915 = vpop.f32.mrb[0].mxu0
      %v1916 = vadd.f32 0.0, %v1915
      %v1917 = vpop.f32.mrb[0].mxu0
      %v1918 = vpop.f32.mrb[0].mxu0
      %v1919 = vadd.f32 0.0, %v1918
      %v1920 = vpop.f32.mrb[0].mxu0
      %1921 = vmatprep.mubr.bf16.mxu0 0
      %1922 = vmatmul.mubr.bf16.gmra.mrb[0].mxu0 %v1860
      %v1923 = vpop.f32.mrb[0].mxu0
      %v1924 = vadd.f32 0.0, %v1923
      %v1925 = vpop.f32.mrb[0].mxu0
      %v1926 = vpop.f32.mrb[0].mxu0
      %v1927 = vadd.f32 0.0, %v1926
      %v1928 = vpop.f32.mrb[0].mxu0
      %1929 = vdwg.mxu0
      %v1930 = vadd.f32 %v1829, %v1900
      %v1931 = vadd.f32 %v1830, %v1903
      %v1932 = vadd.f32 %v1831, %v1908
      %v1933 = vadd.f32 %v1832, %v1911
      %v1934 = vadd.f32 %v1833, %v1916
      %v1935 = vadd.f32 %v1834, %v1919
      %v1936 = vadd.f32 %v1835, %v1924
      %v1937 = vadd.f32 %v1836, %v1927
      %v1938 = vld [vmem:[%s1439 + $0x2] sm:$0xff]
      %v1939 = vld [vmem:[%s1439 + $0x12] sm:$0xff]
      %v1940 = vld [vmem:[%s1439 + $0x22] sm:$0xff]
      %v1941 = vld [vmem:[%s1439 + $0x32] sm:$0xff]
      %v1942 = vld [vmem:[%s1439 + $0x42] sm:$0xff]
      %v1943 = vld [vmem:[%s1439 + $0x52] sm:$0xff]
      %v1944 = vld [vmem:[%s1439 + $0x62] sm:$0xff]
      %v1945 = vld [vmem:[%s1439 + $0x72] sm:$0xff]
      %v1946 = vpack.c.bf16 %v1939, %v1938
      %v1947 = vpack.c.bf16 %v1941, %v1940
      %v1948 = vpack.c.bf16 %v1943, %v1942
      %v1949 = vpack.c.bf16 %v1945, %v1944
      %v1950 = vld [vmem:[%s3 + $0x14] sm:$0xf]
      %v1952 = vsel %vm1411, %v1946, 0
      %v1955 = vsel %vm1411, %v1947, 0
      %v1958 = vsel %vm1411, %v1948, 0
      %v1961 = vsel %vm1411, %v1949, 0
      %v1964 = vsel %vm1486, %v1950, 0
      %1966 = vmatprep.subr.bf16.mxu0 0
      %1967 = vmatpush1.bf16.msra.mxu0 %v1964
      %1968 = vmatprep.subr.bf16.mxu0 0
      %1969 = vmatpush1.bf16.msra.mxu0 0
      %1970 = vmatprep.subr.bf16.mxu0 0
      %1971 = vmatpush1.bf16.msra.mxu0 0
      %1972 = vmatprep.subr.bf16.mxu0 0
      %1973 = vmatpush1.bf16.msra.mxu0 0
      %1974 = vmatprep.subr.bf16.mxu0 0
      %1975 = vmatpush1.bf16.msra.mxu0 0
      %1976 = vmatprep.subr.bf16.mxu0 0
      %1977 = vmatpush1.bf16.msra.mxu0 0
      %1978 = vmatprep.subr.bf16.mxu0 0
      %1979 = vmatpush1.bf16.msra.mxu0 0
      %1980 = vmatprep.subr.bf16.mxu0 0
      %1981 = vmatpush1.bf16.msra.mxu0 0
      %1982 = vmatprep.subr.bf16.mxu0 0
      %1983 = vmatpush1.bf16.msra.mxu0 0
      %1984 = vmatprep.subr.bf16.mxu0 0
      %1985 = vmatpush1.bf16.msra.mxu0 0
      %1986 = vmatprep.subr.bf16.mxu0 0
      %1987 = vmatpush1.bf16.msra.mxu0 0
      %1988 = vmatprep.subr.bf16.mxu0 0
      %1989 = vmatpush1.bf16.msra.mxu0 0
      %1990 = vmatprep.subr.bf16.mxu0 0
      %1991 = vmatpush1.bf16.msra.mxu0 0
      %1992 = vmatprep.subr.bf16.mxu0 0
      %1993 = vmatpush1.bf16.msra.mxu0 0
      %1994 = vmatprep.subr.bf16.mxu0 0
      %1995 = vmatpush1.bf16.msra.mxu0 0
      %1996 = vmatprep.subr.bf16.mxu0 0
      %1997 = vmatpush1.bf16.msra.mxu0 0
      %1998 = vmatprep.mubr.bf16.mxu0 0
      %1999 = vmatmul.mubr.bf16.gmra.mrb[0].mxu0 %v1952
      %v2000 = vpop.f32.mrb[0].mxu0
      %v2001 = vadd.f32 0.0, %v2000
      %v2002 = vpop.f32.mrb[0].mxu0
      %v2003 = vpop.f32.mrb[0].mxu0
      %v2004 = vadd.f32 0.0, %v2003
      %v2005 = vpop.f32.mrb[0].mxu0
      %2006 = vmatprep.mubr.bf16.mxu0 0
      %2007 = vmatmul.mubr.bf16.gmra.mrb[0].mxu0 %v1955
      %v2008 = vpop.f32.mrb[0].mxu0
      %v2009 = vadd.f32 0.0, %v2008
      %v2010 = vpop.f32.mrb[0].mxu0
      %v2011 = vpop.f32.mrb[0].mxu0
      %v2012 = vadd.f32 0.0, %v2011
      %v2013 = vpop.f32.mrb[0].mxu0
      %2014 = vmatprep.mubr.bf16.mxu0 0
      %2015 = vmatmul.mubr.bf16.gmra.mrb[0].mxu0 %v1958
      %v2016 = vpop.f32.mrb[0].mxu0
      %v2017 = vadd.f32 0.0, %v2016
      %v2018 = vpop.f32.mrb[0].mxu0
      %v2019 = vpop.f32.mrb[0].mxu0
      %v2020 = vadd.f32 0.0, %v2019
      %v2021 = vpop.f32.mrb[0].mxu0
      %2022 = vmatprep.mubr.bf16.mxu0 0
      %2023 = vmatmul.mubr.bf16.gmra.mrb[0].mxu0 %v1961
      %v2024 = vpop.f32.mrb[0].mxu0
      %v2025 = vadd.f32 0.0, %v2024
      %v2026 = vpop.f32.mrb[0].mxu0
      %v2027 = vpop.f32.mrb[0].mxu0
      %v2028 = vadd.f32 0.0, %v2027
      %v2029 = vpop.f32.mrb[0].mxu0
      %2030 = vdwg.mxu0
      %v2031 = vadd.f32 %v1930, %v2001
      %v2032 = vadd.f32 %v1931, %v2004
      %v2033 = vadd.f32 %v1932, %v2009
      %v2034 = vadd.f32 %v1933, %v2012
      %v2035 = vadd.f32 %v1934, %v2017
      %v2036 = vadd.f32 %v1935, %v2020
      %v2037 = vadd.f32 %v1936, %v2025
      %v2038 = vadd.f32 %v1937, %v2028
      %s2039 = scalar_lea.vmem [#allocation3], 32
      %v2040 = vld [vmem:[%s2039] sm:$0xff]
      %v2041 = vld [vmem:[%s2039 + $0x10] sm:$0xff]
      %v2042 = vld [vmem:[%s2039 + $0x20] sm:$0xff]
      %v2043 = vld [vmem:[%s2039 + $0x30] sm:$0xff]
      %v2044 = vld [vmem:[%s2039 + $0x40] sm:$0xff]
      %v2045 = vld [vmem:[%s2039 + $0x50] sm:$0xff]
      %v2046 = vld [vmem:[%s2039 + $0x60] sm:$0xff]
      %v2047 = vld [vmem:[%s2039 + $0x70] sm:$0xff]
      %v2048 = vpack.c.bf16 %v2041, %v2040
      %v2049 = vpack.c.bf16 %v2043, %v2042
      %v2050 = vpack.c.bf16 %v2045, %v2044
      %v2051 = vpack.c.bf16 %v2047, %v2046
      %v2052 = vld [vmem:[%s3 + $0x18] sm:$0xf]
      %v2054 = vsel %vm1411, %v2048, 0
      %v2057 = vsel %vm1411, %v2049, 0
      %v2060 = vsel %vm1411, %v2050, 0
      %v2063 = vsel %vm1411, %v2051, 0
      %v2066 = vsel %vm1486, %v2052, 0
      %2068 = vmatprep.subr.bf16.mxu0 0
      %2069 = vmatpush1.bf16.msra.mxu0 %v2066
      %2070 = vmatprep.subr.bf16.mxu0 0
      %2071 = vmatpush1.bf16.msra.mxu0 0
      %2072 = vmatprep.subr.bf16.mxu0 0
      %2073 = vmatpush1.bf16.msra.mxu0 0
      %2074 = vmatprep.subr.bf16.mxu0 0
      %2075 = vmatpush1.bf16.msra.mxu0 0
      %2076 = vmatprep.subr.bf16.mxu0 0
      %2077 = vmatpush1.bf16.msra.mxu0 0
      %2078 = vmatprep.subr.bf16.mxu0 0
      %2079 = vmatpush1.bf16.msra.mxu0 0
      %2080 = vmatprep.subr.bf16.mxu0 0
      %2081 = vmatpush1.bf16.msra.mxu0 0
      %2082 = vmatprep.subr.bf16.mxu0 0
      %2083 = vmatpush1.bf16.msra.mxu0 0
      %2084 = vmatprep.subr.bf16.mxu0 0
      %2085 = vmatpush1.bf16.msra.mxu0 0
      %2086 = vmatprep.subr.bf16.mxu0 0
      %2087 = vmatpush1.bf16.msra.mxu0 0
      %2088 = vmatprep.subr.bf16.mxu0 0
      %2089 = vmatpush1.bf16.msra.mxu0 0
      %2090 = vmatprep.subr.bf16.mxu0 0
      %2091 = vmatpush1.bf16.msra.mxu0 0
      %2092 = vmatprep.subr.bf16.mxu0 0
      %2093 = vmatpush1.bf16.msra.mxu0 0
      %2094 = vmatprep.subr.bf16.mxu0 0
      %2095 = vmatpush1.bf16.msra.mxu0 0
      %2096 = vmatprep.subr.bf16.mxu0 0
      %2097 = vmatpush1.bf16.msra.mxu0 0
      %2098 = vmatprep.subr.bf16.mxu0 0
      %2099 = vmatpush1.bf16.msra.mxu0 0
      %2100 = vmatprep.mubr.bf16.mxu0 0
      %2101 = vmatmul.mubr.bf16.gmra.mrb[0].mxu0 %v2054
      %v2102 = vpop.f32.mrb[0].mxu0
      %v2103 = vadd.f32 0.0, %v2102
      %v2104 = vpop.f32.mrb[0].mxu0
      %v2105 = vpop.f32.mrb[0].mxu0
      %v2106 = vadd.f32 0.0, %v2105
      %v2107 = vpop.f32.mrb[0].mxu0
      %2108 = vmatprep.mubr.bf16.mxu0 0
      %2109 = vmatmul.mubr.bf16.gmra.mrb[0].mxu0 %v2057
      %v2110 = vpop.f32.mrb[0].mxu0
      %v2111 = vadd.f32 0.0, %v2110
      %v2112 = vpop.f32.mrb[0].mxu0
      %v2113 = vpop.f32.mrb[0].mxu0
      %v2114 = vadd.f32 0.0, %v2113
      %v2115 = vpop.f32.mrb[0].mxu0
      %2116 = vmatprep.mubr.bf16.mxu0 0
      %2117 = vmatmul.mubr.bf16.gmra.mrb[0].mxu0 %v2060
      %v2118 = vpop.f32.mrb[0].mxu0
      %v2119 = vadd.f32 0.0, %v2118
      %v2120 = vpop.f32.mrb[0].mxu0
      %v2121 = vpop.f32.mrb[0].mxu0
      %v2122 = vadd.f32 0.0, %v2121
      %v2123 = vpop.f32.mrb[0].mxu0
      %2124 = vmatprep.mubr.bf16.mxu0 0
      %2125 = vmatmul.mubr.bf16.gmra.mrb[0].mxu0 %v2063
      %v2126 = vpop.f32.mrb[0].mxu0
      %v2127 = vadd.f32 0.0, %v2126
      %v2128 = vpop.f32.mrb[0].mxu0
      %v2129 = vpop.f32.mrb[0].mxu0
      %v2130 = vadd.f32 0.0, %v2129
      %v2131 = vpop.f32.mrb[0].mxu0
      %2132 = vdwg.mxu0
      %v2133 = vadd.f32 %v2031, %v2103
      %v2134 = vadd.f32 %v2032, %v2106
      %v2135 = vadd.f32 %v2033, %v2111
      %v2136 = vadd.f32 %v2034, %v2114
      %v2137 = vadd.f32 %v2035, %v2119
      %v2138 = vadd.f32 %v2036, %v2122
      %v2139 = vadd.f32 %v2037, %v2127
      %v2140 = vadd.f32 %v2038, %v2130
      %v2141 = vld [vmem:[%s2039 + $0x1] sm:$0xff]
      %v2142 = vld [vmem:[%s2039 + $0x11] sm:$0xff]
      %v2143 = vld [vmem:[%s2039 + $0x21] sm:$0xff]
      %v2144 = vld [vmem:[%s2039 + $0x31] sm:$0xff]
      %v2145 = vld [vmem:[%s2039 + $0x41] sm:$0xff]
      %v2146 = vld [vmem:[%s2039 + $0x51] sm:$0xff]
      %v2147 = vld [vmem:[%s2039 + $0x61] sm:$0xff]
      %v2148 = vld [vmem:[%s2039 + $0x71] sm:$0xff]
      %v2149 = vpack.c.bf16 %v2142, %v2141
      %v2150 = vpack.c.bf16 %v2144, %v2143
      %v2151 = vpack.c.bf16 %v2146, %v2145
      %v2152 = vpack.c.bf16 %v2148, %v2147
      %v2153 = vld [vmem:[%s3 + $0x1c] sm:$0xf]
      %v2155 = vsel %vm1411, %v2149, 0
      %v2158 = vsel %vm1411, %v2150, 0
      %v2161 = vsel %vm1411, %v2151, 0
      %v2164 = vsel %vm1411, %v2152, 0
      %v2167 = vsel %vm1486, %v2153, 0
      %2169 = vmatprep.subr.bf16.mxu0 0
      %2170 = vmatpush1.bf16.msra.mxu0 %v2167
      %2171 = vmatprep.subr.bf16.mxu0 0
      %2172 = vmatpush1.bf16.msra.mxu0 0
      %2173 = vmatprep.subr.bf16.mxu0 0
      %2174 = vmatpush1.bf16.msra.mxu0 0
      %2175 = vmatprep.subr.bf16.mxu0 0
      %2176 = vmatpush1.bf16.msra.mxu0 0
      %2177 = vmatprep.subr.bf16.mxu0 0
      %2178 = vmatpush1.bf16.msra.mxu0 0
      %2179 = vmatprep.subr.bf16.mxu0 0
      %2180 = vmatpush1.bf16.msra.mxu0 0
      %2181 = vmatprep.subr.bf16.mxu0 0
      %2182 = vmatpush1.bf16.msra.mxu0 0
      %2183 = vmatprep.subr.bf16.mxu0 0
      %2184 = vmatpush1.bf16.msra.mxu0 0
      %2185 = vmatprep.subr.bf16.mxu0 0
      %2186 = vmatpush1.bf16.msra.mxu0 0
      %2187 = vmatprep.subr.bf16.mxu0 0
      %2188 = vmatpush1.bf16.msra.mxu0 0
      %2189 = vmatprep.subr.bf16.mxu0 0
      %2190 = vmatpush1.bf16.msra.mxu0 0
      %2191 = vmatprep.subr.bf16.mxu0 0
      %2192 = vmatpush1.bf16.msra.mxu0 0
      %2193 = vmatprep.subr.bf16.mxu0 0
      %2194 = vmatpush1.bf16.msra.mxu0 0
      %2195 = vmatprep.subr.bf16.mxu0 0
      %2196 = vmatpush1.bf16.msra.mxu0 0
      %2197 = vmatprep.subr.bf16.mxu0 0
      %2198 = vmatpush1.bf16.msra.mxu0 0
      %2199 = vmatprep.subr.bf16.mxu0 0
      %2200 = vmatpush1.bf16.msra.mxu0 0
      %2201 = vmatprep.mubr.bf16.mxu0 0
      %2202 = vmatmul.mubr.bf16.gmra.mrb[0].mxu0 %v2155
      %v2203 = vpop.f32.mrb[0].mxu0
      %v2204 = vadd.f32 0.0, %v2203
      %v2205 = vpop.f32.mrb[0].mxu0
      %v2206 = vpop.f32.mrb[0].mxu0
      %v2207 = vadd.f32 0.0, %v2206
      %v2208 = vpop.f32.mrb[0].mxu0
      %2209 = vmatprep.mubr.bf16.mxu0 0
      %2210 = vmatmul.mubr.bf16.gmra.mrb[0].mxu0 %v2158
      %v2211 = vpop.f32.mrb[0].mxu0
      %v2212 = vadd.f32 0.0, %v2211
      %v2213 = vpop.f32.mrb[0].mxu0
      %v2214 = vpop.f32.mrb[0].mxu0
      %v2215 = vadd.f32 0.0, %v2214
      %v2216 = vpop.f32.mrb[0].mxu0
      %2217 = vmatprep.mubr.bf16.mxu0 0
      %2218 = vmatmul.mubr.bf16.gmra.mrb[0].mxu0 %v2161
      %v2219 = vpop.f32.mrb[0].mxu0
      %v2220 = vadd.f32 0.0, %v2219
      %v2221 = vpop.f32.mrb[0].mxu0
      %v2222 = vpop.f32.mrb[0].mxu0
      %v2223 = vadd.f32 0.0, %v2222
      %v2224 = vpop.f32.mrb[0].mxu0
      %2225 = vmatprep.mubr.bf16.mxu0 0
      %2226 = vmatmul.mubr.bf16.gmra.mrb[0].mxu0 %v2164
      %v2227 = vpop.f32.mrb[0].mxu0
      %v2228 = vadd.f32 0.0, %v2227
      %v2229 = vpop.f32.mrb[0].mxu0
      %v2230 = vpop.f32.mrb[0].mxu0
      %v2231 = vadd.f32 0.0, %v2230
      %v2232 = vpop.f32.mrb[0].mxu0
      %2233 = vdwg.mxu0
      %v2234 = vadd.f32 %v2133, %v2204
      %v2235 = vadd.f32 %v2134, %v2207
      %v2236 = vadd.f32 %v2135, %v2212
      %v2237 = vadd.f32 %v2136, %v2215
      %v2238 = vadd.f32 %v2137, %v2220
      %v2239 = vadd.f32 %v2138, %v2223
      %v2240 = vadd.f32 %v2139, %v2228
      %v2241 = vadd.f32 %v2140, %v2231
      %v2242 = vld [vmem:[%s2039 + $0x2] sm:$0xff]
      %v2243 = vld [vmem:[%s2039 + $0x12] sm:$0xff]
      %v2244 = vld [vmem:[%s2039 + $0x22] sm:$0xff]
      %v2245 = vld [vmem:[%s2039 + $0x32] sm:$0xff]
      %v2246 = vld [vmem:[%s2039 + $0x42] sm:$0xff]
      %v2247 = vld [vmem:[%s2039 + $0x52] sm:$0xff]
      %v2248 = vld [vmem:[%s2039 + $0x62] sm:$0xff]
      %v2249 = vld [vmem:[%s2039 + $0x72] sm:$0xff]
      %v2250 = vpack.c.bf16 %v2243, %v2242
      %v2251 = vpack.c.bf16 %v2245, %v2244
      %v2252 = vpack.c.bf16 %v2247, %v2246
      %v2253 = vpack.c.bf16 %v2249, %v2248
      %v2254 = vld [vmem:[%s3 + $0x20] sm:$0xf]
      %v2256 = vsel %vm1411, %v2250, 0
      %v2259 = vsel %vm1411, %v2251, 0
      %v2262 = vsel %vm1411, %v2252, 0
      %v2265 = vsel %vm1411, %v2253, 0
      %v2268 = vsel %vm1486, %v2254, 0
      %2270 = vmatprep.subr.bf16.mxu0 0
      %2271 = vmatpush1.bf16.msra.mxu0 %v2268
      %2272 = vmatprep.subr.bf16.mxu0 0
      %2273 = vmatpush1.bf16.msra.mxu0 0
      %2274 = vmatprep.subr.bf16.mxu0 0
      %2275 = vmatpush1.bf16.msra.mxu0 0
      %2276 = vmatprep.subr.bf16.mxu0 0
      %2277 = vmatpush1.bf16.msra.mxu0 0
      %2278 = vmatprep.subr.bf16.mxu0 0
      %2279 = vmatpush1.bf16.msra.mxu0 0
      %2280 = vmatprep.subr.bf16.mxu0 0
      %2281 = vmatpush1.bf16.msra.mxu0 0
      %2282 = vmatprep.subr.bf16.mxu0 0
      %2283 = vmatpush1.bf16.msra.mxu0 0
      %2284 = vmatprep.subr.bf16.mxu0 0
      %2285 = vmatpush1.bf16.msra.mxu0 0
      %2286 = vmatprep.subr.bf16.mxu0 0
      %2287 = vmatpush1.bf16.msra.mxu0 0
      %2288 = vmatprep.subr.bf16.mxu0 0
      %2289 = vmatpush1.bf16.msra.mxu0 0
      %2290 = vmatprep.subr.bf16.mxu0 0
      %2291 = vmatpush1.bf16.msra.mxu0 0
      %2292 = vmatprep.subr.bf16.mxu0 0
      %2293 = vmatpush1.bf16.msra.mxu0 0
      %2294 = vmatprep.subr.bf16.mxu0 0
      %2295 = vmatpush1.bf16.msra.mxu0 0
      %2296 = vmatprep.subr.bf16.mxu0 0
      %2297 = vmatpush1.bf16.msra.mxu0 0
      %2298 = vmatprep.subr.bf16.mxu0 0
      %2299 = vmatpush1.bf16.msra.mxu0 0
      %2300 = vmatprep.subr.bf16.mxu0 0
      %2301 = vmatpush1.bf16.msra.mxu0 0
      %2302 = vmatprep.mubr.bf16.mxu0 0
      %2303 = vmatmul.mubr.bf16.gmra.mrb[0].mxu0 %v2256
      %v2304 = vpop.f32.mrb[0].mxu0
      %v2305 = vadd.f32 0.0, %v2304
      %v2306 = vpop.f32.mrb[0].mxu0
      %v2307 = vpop.f32.mrb[0].mxu0
      %v2308 = vadd.f32 0.0, %v2307
      %v2309 = vpop.f32.mrb[0].mxu0
      %2310 = vmatprep.mubr.bf16.mxu0 0
      %2311 = vmatmul.mubr.bf16.gmra.mrb[0].mxu0 %v2259
      %v2312 = vpop.f32.mrb[0].mxu0
      %v2313 = vadd.f32 0.0, %v2312
      %v2314 = vpop.f32.mrb[0].mxu0
      %v2315 = vpop.f32.mrb[0].mxu0
      %v2316 = vadd.f32 0.0, %v2315
      %v2317 = vpop.f32.mrb[0].mxu0
      %2318 = vmatprep.mubr.bf16.mxu0 0
      %2319 = vmatmul.mubr.bf16.gmra.mrb[0].mxu0 %v2262
      %v2320 = vpop.f32.mrb[0].mxu0
      %v2321 = vadd.f32 0.0, %v2320
      %v2322 = vpop.f32.mrb[0].mxu0
      %v2323 = vpop.f32.mrb[0].mxu0
      %v2324 = vadd.f32 0.0, %v2323
      %v2325 = vpop.f32.mrb[0].mxu0
      %2326 = vmatprep.mubr.bf16.mxu0 0
      %2327 = vmatmul.mubr.bf16.gmra.mrb[0].mxu0 %v2265
      %v2328 = vpop.f32.mrb[0].mxu0
      %v2329 = vadd.f32 0.0, %v2328
      %v2330 = vpop.f32.mrb[0].mxu0
      %v2331 = vpop.f32.mrb[0].mxu0
      %v2332 = vadd.f32 0.0, %v2331
      %v2333 = vpop.f32.mrb[0].mxu0
      %2334 = vdwg.mxu0
      %v2335 = vadd.f32 %v2234, %v2305
      %v2336 = vadd.f32 %v2235, %v2308
      %v2337 = vadd.f32 %v2236, %v2313
      %v2338 = vadd.f32 %v2237, %v2316
      %v2339 = vadd.f32 %v2238, %v2321
      %v2340 = vadd.f32 %v2239, %v2324
      %v2341 = vadd.f32 %v2240, %v2329
      %v2342 = vadd.f32 %v2241, %v2332
      %v2343 = vld [vmem:[%s6] sm:$0x1]
      %v2345 = vlaneseq
      %v2346 = vshrl.u32 %v2345, 7
      %v2347 = vsub.s32 0, %v2346
      %v2348 = vrot.slane %v2343, %v2347
      %v2350 = vmul.f32 %v2335, %v2348
      %v2351 = vmul.f32 %v2336, %v2348
      %v2352 = vmul.f32 %v2337, %v2348
      %v2353 = vmul.f32 %v2338, %v2348
      %v2354 = vmul.f32 %v2339, %v2348
      %v2355 = vmul.f32 %v2340, %v2348
      %v2356 = vmul.f32 %v2341, %v2348
      %v2357 = vmul.f32 %v2342, %v2348
      %v2358 = vld [vmem:[%s7] sm:$0x1]
      %v2360 = vlaneseq
      %v2361 = vshrl.u32 %v2360, 7
      %v2362 = vsub.s32 0, %v2361
      %v2363 = vrot.slane %v2358, %v2362
      %v2365 = vadd.f32 %v2350, %v2363
      %v2366 = vadd.f32 %v2351, %v2363
      %v2367 = vadd.f32 %v2352, %v2363
      %v2368 = vadd.f32 %v2353, %v2363
      %v2369 = vadd.f32 %v2354, %v2363
      %v2370 = vadd.f32 %v2355, %v2363
      %v2371 = vadd.f32 %v2356, %v2363
      %v2372 = vadd.f32 %v2357, %v2363
      %v2373 = vmax.f32 %v2365, 0.0
      %v2374 = vmax.f32 %v2366, 0.0
      %v2375 = vmax.f32 %v2367, 0.0
      %v2376 = vmax.f32 %v2368, 0.0
      %v2377 = vmax.f32 %v2369, 0.0
      %v2378 = vmax.f32 %v2370, 0.0
      %v2379 = vmax.f32 %v2371, 0.0
      %v2380 = vmax.f32 %v2372, 0.0
      %v2381 = vld [vmem:[%s314] sm:$0x1]
      %v2383 = vlaneseq
      %v2384 = vshrl.u32 %v2383, 7
      %v2385 = vsub.s32 0, %v2384
      %v2386 = vrot.slane %v2381, %v2385
      %v2388 = vadd.f32 %v2373, %v2386
      %v2389 = vadd.f32 %v2374, %v2386
      %v2390 = vadd.f32 %v2375, %v2386
      %v2391 = vadd.f32 %v2376, %v2386
      %v2392 = vadd.f32 %v2377, %v2386
      %v2393 = vadd.f32 %v2378, %v2386
      %v2394 = vadd.f32 %v2379, %v2386
      %v2395 = vadd.f32 %v2380, %v2386
      %2396 = vst.msk [vmem:[%s319] sm:$0xff] %vm1411, %v2388
      %2397 = vst.msk [vmem:[%s319 + $0x8] sm:$0xff] %vm1411, %v2389
      %2398 = vst.msk [vmem:[%s319 + $0x10] sm:$0xff] %vm1411, %v2390
      %2399 = vst.msk [vmem:[%s319 + $0x18] sm:$0xff] %vm1411, %v2391
      %2400 = vst.msk [vmem:[%s319 + $0x20] sm:$0xff] %vm1411, %v2392
      %2401 = vst.msk [vmem:[%s319 + $0x28] sm:$0xff] %vm1411, %v2393
      %2402 = vst.msk [vmem:[%s319 + $0x30] sm:$0xff] %vm1411, %v2394
      %2403 = vst.msk [vmem:[%s319 + $0x38] sm:$0xff] %vm1411, %v2395
      %p2404 = scmp.lt.s32.totalorder %s19, 1
      %s2405 = scalar_select %p2404, %s19, 1
      %s2406 = smul.addr %s2405, 8
      %s2407 = smul.addr %s2406, 8
      %s2408 = scalar_lea.vmem %s8, %s2407
      // Predicated region
      $region53: #{downsample_forward.1} parent=51 // pred_check
        %p2409 = pneg %p215
      $region54: #{downsample_forward.1} parent=51 // pred_check_branch
        %2411 = sbr.rel (%p2409) target = $region56
      $region55: #{downsample_forward.1} parent=51 // pred_region
        _
      $region56: #{downsample_forward.1} parent=51 // pred_fallthru
        _
    $region52: #{downsample_forward.1} parent=5 // pred_fallthru
      _
    %p2412 = scmp.le.s32.totalorder 2, %s14
    // Predicated region
    $region57: #{downsample_forward.1} parent=5 // pred_check
      %p2413 = pneg %p2412
    $region58: #{downsample_forward.1} parent=5 // pred_check_branch
      %2415 = sbr.rel (%p2413) target = $region60
    $region59: #{downsample_forward.1} parent=5 // pred_region
      %s2416 = ssub.s32 %s14, 2
      // Predicated region
      $region61: #{downsample_forward.1} parent=59 // pred_check
        %p2417 = pneg %p221
      $region62: #{downsample_forward.1} parent=59 // pred_check_branch
        %2419 = sbr.rel (%p2417) target = $region64
      $region63: #{downsample_forward.1} parent=59 // pred_region
        %p2420 = scmp.lt.s32.totalorder %s20, 1
        %s2421 = scalar_select %p2420, %s20, 1
        %s2422 = smul.addr %s2421, 8
        %s2423 = smul.addr %s2422, 8
        %s2424 = scalar_lea.vmem %s8, %s2423
      $region64: #{downsample_forward.1} parent=59 // pred_fallthru
        _
    $region60: #{downsample_forward.1} parent=5 // pred_fallthru
      _
  $region6: #{downsample_forward.1} parent=0 // loop_footer
    %s18 = sadd.s32 1, %s14
  $region7: #{downsample_forward.1} parent=0 // loop_footer_branch
    %13 = sbr.rel target = $region3
  $region8: #{downsample_forward.1} parent=0 // loop_exit
    _

</llo_original>
